<compile_context>
chip_gen: v6e
topology: v6e:2x2x1
jax: 0.10.0
libtpu: 0.0.40
codegen_flags: <defaults>
</compile_context>

<pallas_src>
import functools

import jax
import jax.numpy as jnp
from jax.experimental import pallas as pl
from jax.experimental.pallas import tpu as pltpu


def _round_up(x, m):
    return (x + m - 1) // m * m


# --------------------------------------------------------------------------
# Kernel
# --------------------------------------------------------------------------
def _textcnn_kernel(emb_ref, wconv_ref, bconv_ref, wfc_ref, bfc_ref, out_ref,
                    *, lens, l_pad, f_pad, max_fs):
    """Fused conv(as shifted matmuls) + bias + ReLU + masked max-pool + FC.

    emb_ref  : (TB, T_pad, E_pad)   compute dtype (f32 or bf16)
    wconv_ref: (max_fs, E_pad, NF)  compute dtype; NF = n_groups * f_pad
    bconv_ref: (1, NF)              f32
    wfc_ref  : (NF, C_pad)          compute dtype
    bfc_ref  : (1, C_pad)           f32
    out_ref  : (TB, C_pad)          f32
    """
    tb, _, e_pad = emb_ref.shape
    nf = wconv_ref.shape[-1]
    m = tb * l_pad

    # Conv for all filter sizes at once: max_fs shifted matmuls, f32 accumulate.
    acc = jnp.zeros((m, nf), jnp.float32)
    for i in range(max_fs):                               # static unroll
        x = emb_ref[:, i:i + l_pad, :].reshape(m, e_pad)  # static slice
        acc = acc + jnp.dot(x, wconv_ref[i],
                            preferred_element_type=jnp.float32)

    s = jnp.maximum(acc + bconv_ref[...], 0.0)            # bias + ReLU (f32)
    s = s.reshape(tb, l_pad, nf)

    # Mask time positions past each filter-size's valid length L_fs = T-fs+1.
    # Zeroing invalid rows is safe post-ReLU (valid max >= 0).
    row = jax.lax.broadcasted_iota(jnp.int32, (l_pad, nf), 0)
    col = jax.lax.broadcasted_iota(jnp.int32, (l_pad, nf), 1)
    mask = jnp.zeros((l_pad, nf), jnp.bool_)
    for g, L in enumerate(lens):                          # static, 3 groups
        in_group = (col >= g * f_pad) & (col < (g + 1) * f_pad)
        mask = mask | (in_group & (row < L))
    s = jnp.where(mask[None, :, :], s, 0.0)

    pooled = jnp.max(s, axis=1)                           # (TB, NF): pool over time

    # TODO(synk): dropout(p=0.3) is eval-mode identity (no RNG masking).
    logits = jnp.dot(pooled.astype(wfc_ref.dtype), wfc_ref[...],
                     preferred_element_type=jnp.float32)
    out_ref[...] = logits + bfc_ref[...]


# --------------------------------------------------------------------------
# One-time parameter packing (hoisted out of per-call work)
# --------------------------------------------------------------------------
def pack_params(params, *, filter_sizes, f_pad=128, c_pad=128,
                dtype=jnp.float32):
    """Repack PyTorch-layout params into fused, lane-padded kernel operands."""
    F = params["conv_w"][0].shape[0]
    C = params["fc_w"].shape[0]
    E = params["embedding"].shape[1]
    e_pad = _round_up(E, 128)
    max_fs = max(filter_sizes)
    n_groups = len(filter_sizes)
    nf = n_groups * f_pad

    # Combined per-shift conv weights: (max_fs, E_pad, NF); zero where the
    # shift i >= fs for that group or the filter index >= F.
    w_conv = jnp.zeros((max_fs, e_pad, nf), jnp.float32)
    b_conv = jnp.zeros((1, nf), jnp.float32)
    for g, fs in enumerate(filter_sizes):
        w = params["conv_w"][g][:, 0]                     # (F, fs, E)
        for i in range(fs):
            w_conv = w_conv.at[i, :E, g * f_pad:g * f_pad + F].set(w[:, i, :].T)
        b_conv = b_conv.at[0, g * f_pad:g * f_pad + F].set(params["conv_b"][g])

    # FC: rows re-indexed to the padded pooled layout, C padded to 128 lanes.
    w_fc = jnp.zeros((nf, c_pad), jnp.float32)
    fc_t = params["fc_w"].T                               # (n_groups*F, C)
    for g in range(n_groups):
        w_fc = w_fc.at[g * f_pad:g * f_pad + F, :C].set(fc_t[g * F:(g + 1) * F, :])
    b_fc = jnp.zeros((1, c_pad), jnp.float32).at[0, :C].set(params["fc_b"])

    emb_tab = params["embedding"]
    if e_pad != E:
        emb_tab = jnp.pad(emb_tab, ((0, 0), (0, e_pad - E)))

    return dict(embedding=emb_tab.astype(dtype),
                w_conv=w_conv.astype(dtype), b_conv=b_conv,
                w_fc=w_fc.astype(dtype), b_fc=b_fc,
                filter_sizes=tuple(filter_sizes),
                f_pad=f_pad, c_pad=c_pad, num_class=C)


# --------------------------------------------------------------------------
# Forward pass
# --------------------------------------------------------------------------
def cnn_forward(text, packed, *, batch_tile=8):
    """Pallas forward pass. text: (B, T) int32 token ids."""
    fsz = packed["filter_sizes"]
    max_fs = max(fsz)
    B, T = text.shape
    if T < max_fs:
        raise ValueError(f"sequence length {T} < max filter size {max_fs}")
    assert batch_tile % 8 == 0, "batch_tile must be a multiple of 8"

    f_pad, c_pad = packed["f_pad"], packed["c_pad"]
    nf = len(fsz) * f_pad
    lens = tuple(T - fs + 1 for fs in fsz)                # static valid lengths
    l_pad = _round_up(max(lens), 8)
    t_pad = _round_up(l_pad + max_fs - 1, 8)
    b_pad = _round_up(B, batch_tile)

    # Embedding gather (XLA glue) + zero padding of batch / time / embed dims.
    # TODO(synk): at large B*T the gather could move into the kernel via
    # PrefetchScalarGridSpec scalar-prefetched token ids + pl.Element rows.
    emb = packed["embedding"][text]                       # (B, T, E_pad)
    e_pad = emb.shape[-1]
    emb = jnp.pad(emb, ((0, b_pad - B), (0, t_pad - T), (0, 0)))

    kernel = functools.partial(_textcnn_kernel, lens=lens, l_pad=l_pad,
                               f_pad=f_pad, max_fs=max_fs)

    out = pl.pallas_call(
        kernel,
        out_shape=jax.ShapeDtypeStruct((b_pad, c_pad), jnp.float32),
        grid_spec=pltpu.PrefetchScalarGridSpec(
            num_scalar_prefetch=0,
            grid=(b_pad // batch_tile,),
            in_specs=[
                pl.BlockSpec((batch_tile, t_pad, e_pad), lambda b: (b, 0, 0)),
                pl.BlockSpec((max_fs, e_pad, nf), lambda b: (0, 0, 0)),
                pl.BlockSpec((1, nf), lambda b: (0, 0)),
                pl.BlockSpec((nf, c_pad), lambda b: (0, 0)),
                pl.BlockSpec((1, c_pad), lambda b: (0, 0)),
            ],
            out_specs=pl.BlockSpec((batch_tile, c_pad), lambda b: (b, 0)),
        ),
        compiler_params=pltpu.CompilerParams(
            dimension_semantics=("parallel",),
            vmem_limit_bytes=32 * 1024 * 1024),
    )(emb, packed["w_conv"], packed["b_conv"], packed["w_fc"], packed["b_fc"])

    return out[:B, :packed["num_class"]]


# --------------------------------------------------------------------------
# Pure-JAX reference (matches the PyTorch eval-mode forward)
# --------------------------------------------------------------------------
def cnn_reference(text, params, *, filter_sizes):
    emb = params["embedding"][text]                       # (B, T, E)
    x = emb[:, None, :, :]                                # (B, 1, T, E) == NCHW
    pooled = []
    for idx in range(len(filter_sizes)):
        W = params["conv_w"][idx]                         # (F, 1, fs, E) == OIHW
        b = params["conv_b"][idx]
        conv = jax.lax.conv_general_dilated(
            x, W, (1, 1), "VALID",
            dimension_numbers=("NCHW", "OIHW", "NCHW")) + b.reshape(1, -1, 1, 1)
        conv = jnp.maximum(conv, 0.0)[..., 0]             # (B, F, L)
        pooled.append(conv.max(axis=2))                   # (B, F)
    cat = jnp.concatenate(pooled, axis=1)
    return cat @ params["fc_w"].T + params["fc_b"]


def init_params(key, *, vocab_size, embed_dim, num_filters, filter_sizes,
                num_class):
    ks = jax.random.split(key, 3 + 2 * len(filter_sizes))
    params = {
        "embedding": jax.random.normal(ks[0], (vocab_size, embed_dim),
                                       jnp.float32),
        "fc_w": 0.1 * jax.random.normal(
            ks[1], (num_class, len(filter_sizes) * num_filters), jnp.float32),
        "fc_b": 0.1 * jax.random.normal(ks[2], (num_class,), jnp.float32),
        "conv_w": [],
        "conv_b": [],
    }
    for i, fs in enumerate(filter_sizes):
        params["conv_w"].append(
            0.1 * jax.random.normal(ks[3 + 2 * i],
                                    (num_filters, 1, fs, embed_dim),
                                    jnp.float32))
        params["conv_b"].append(
            0.1 * jax.random.normal(ks[4 + 2 * i], (num_filters,), jnp.float32))
    return params


if __name__ == "__main__":
    # Small, forward-consistent shapes.
    vocab_size, embed_dim = 50, 32
    num_filters, filter_sizes, num_class = 8, (2, 3, 4), 4
    B, T = 2, 8

    key = jax.random.PRNGKey(0)
    k_tok, k_par = jax.random.split(key)
    text = jax.random.randint(k_tok, (B, T), 0, vocab_size, dtype=jnp.int32)
    params = init_params(k_par, vocab_size=vocab_size, embed_dim=embed_dim,
                         num_filters=num_filters, filter_sizes=filter_sizes,
                         num_class=num_class)

    ref = cnn_reference(text, params, filter_sizes=filter_sizes)

    # f32 compute path.
    packed_f32 = pack_params(params, filter_sizes=filter_sizes,
                             dtype=jnp.float32)
    out = jax.block_until_ready(cnn_forward(text, packed_f32))
    assert out.shape == (B, num_class)
    assert jnp.allclose(out, ref, rtol=2e-2, atol=2e-2), (out, ref)

    # bf16 compute path (v6e/v7x MXU), f32 accumulation -- looser tolerance.
    packed_bf16 = pack_params(params, filter_sizes=filter_sizes,
                              dtype=jnp.bfloat16)
    out_bf16 = jax.block_until_ready(cnn_forward(text, packed_bf16))
    assert out_bf16.shape == (B, num_class)
    assert jnp.allclose(out_bf16, ref, rtol=5e-2, atol=1e-1), (out_bf16, ref)

    print("KERNEL_OK")
</pallas_src>

<mosaic_0001>
module attributes {stable_mosaic.version = 11 : i64} {
  func.func @_textcnn_kernel(%arg0: i32, %arg1: memref<8x16x128xf32, #tpu.memory_space<vmem>>, %arg2: memref<4x128x384xf32, #tpu.memory_space<vmem>>, %arg3: memref<1x384xf32, #tpu.memory_space<vmem>>, %arg4: memref<384x128xf32, #tpu.memory_space<vmem>>, %arg5: memref<1x128xf32, #tpu.memory_space<vmem>>, %arg6: memref<8x128xf32, #tpu.memory_space<vmem>>) attributes {dimension_semantics = [#tpu.dimension_semantics<parallel>], iteration_bounds = array<i64: 1>, scalar_prefetch = 0 : i64, scratch_operands = 0 : i64, tpu.core_type = #tpu.core_type<tc>, window_params = [{transform_indices = @transform_0, window_bounds = array<i64: 8, 16, 128>}, {pipeline_mode = #tpu.pipeline_mode<synchronous>, transform_indices = @transform_1, window_bounds = array<i64: 4, 128, 384>}, {pipeline_mode = #tpu.pipeline_mode<synchronous>, transform_indices = @transform_2, window_bounds = array<i64: 1, 384>}, {pipeline_mode = #tpu.pipeline_mode<synchronous>, transform_indices = @transform_3, window_bounds = array<i64: 384, 128>}, {pipeline_mode = #tpu.pipeline_mode<synchronous>, transform_indices = @transform_4, window_bounds = array<i64: 1, 128>}, {transform_indices = @transform_5, window_bounds = array<i64: 8, 128>}]} {
    %cst = arith.constant 0.000000e+00 : f32
    %0 = vector.broadcast %cst : f32 to vector<64x384xf32>
    %c0 = arith.constant 0 : index
    %c0_0 = arith.constant 0 : index
    %c0_1 = arith.constant 0 : index
    %1 = vector.load %arg1[%c0, %c0_0, %c0_1] : memref<8x16x128xf32, #tpu.memory_space<vmem>>, vector<8x8x128xf32>
    %2 = vector.shape_cast %1 : vector<8x8x128xf32> to vector<64x128xf32>
    %c0_2 = arith.constant 0 : index
    %c0_3 = arith.constant 0 : index
    %c0_4 = arith.constant 0 : index
    %3 = vector.load %arg2[%c0_2, %c0_3, %c0_4] : memref<4x128x384xf32, #tpu.memory_space<vmem>>, vector<1x128x384xf32>
    %4 = vector.shape_cast %3 : vector<1x128x384xf32> to vector<128x384xf32>
    %cst_5 = arith.constant dense<0.000000e+00> : vector<64x384xf32>
    %5 = tpu.matmul %2, %4, %cst_5 {dimension_numbers = #tpu.dot_dimension_numbers<[1], [0], [0], [1], [0, 0, 1, 1], [], []>} : vector<64x128xf32>, vector<128x384xf32>, vector<64x384xf32> -> vector<64x384xf32>
    %6 = arith.addf %0, %5 : vector<64x384xf32>
    %c0_6 = arith.constant 0 : index
    %c1 = arith.constant 1 : index
    %c0_7 = arith.constant 0 : index
    %7 = vector.load %arg1[%c0_6, %c1, %c0_7] : memref<8x16x128xf32, #tpu.memory_space<vmem>>, vector<8x8x128xf32>
    %8 = vector.shape_cast %7 : vector<8x8x128xf32> to vector<64x128xf32>
    %c1_8 = arith.constant 1 : index
    %c0_9 = arith.constant 0 : index
    %c0_10 = arith.constant 0 : index
    %9 = vector.load %arg2[%c1_8, %c0_9, %c0_10] : memref<4x128x384xf32, #tpu.memory_space<vmem>>, vector<1x128x384xf32>
    %10 = vector.shape_cast %9 : vector<1x128x384xf32> to vector<128x384xf32>
    %cst_11 = arith.constant dense<0.000000e+00> : vector<64x384xf32>
    %11 = tpu.matmul %8, %10, %cst_11 {dimension_numbers = #tpu.dot_dimension_numbers<[1], [0], [0], [1], [0, 0, 1, 1], [], []>} : vector<64x128xf32>, vector<128x384xf32>, vector<64x384xf32> -> vector<64x384xf32>
    %12 = arith.addf %6, %11 : vector<64x384xf32>
    %c0_12 = arith.constant 0 : index
    %c2 = arith.constant 2 : index
    %c0_13 = arith.constant 0 : index
    %13 = vector.load %arg1[%c0_12, %c2, %c0_13] : memref<8x16x128xf32, #tpu.memory_space<vmem>>, vector<8x8x128xf32>
    %14 = vector.shape_cast %13 : vector<8x8x128xf32> to vector<64x128xf32>
    %c2_14 = arith.constant 2 : index
    %c0_15 = arith.constant 0 : index
    %c0_16 = arith.constant 0 : index
    %15 = vector.load %arg2[%c2_14, %c0_15, %c0_16] : memref<4x128x384xf32, #tpu.memory_space<vmem>>, vector<1x128x384xf32>
    %16 = vector.shape_cast %15 : vector<1x128x384xf32> to vector<128x384xf32>
    %cst_17 = arith.constant dense<0.000000e+00> : vector<64x384xf32>
    %17 = tpu.matmul %14, %16, %cst_17 {dimension_numbers = #tpu.dot_dimension_numbers<[1], [0], [0], [1], [0, 0, 1, 1], [], []>} : vector<64x128xf32>, vector<128x384xf32>, vector<64x384xf32> -> vector<64x384xf32>
    %18 = arith.addf %12, %17 : vector<64x384xf32>
    %c0_18 = arith.constant 0 : index
    %c3 = arith.constant 3 : index
    %c0_19 = arith.constant 0 : index
    %19 = vector.load %arg1[%c0_18, %c3, %c0_19] : memref<8x16x128xf32, #tpu.memory_space<vmem>>, vector<8x8x128xf32>
    %20 = vector.shape_cast %19 : vector<8x8x128xf32> to vector<64x128xf32>
    %c3_20 = arith.constant 3 : index
    %c0_21 = arith.constant 0 : index
    %c0_22 = arith.constant 0 : index
    %21 = vector.load %arg2[%c3_20, %c0_21, %c0_22] : memref<4x128x384xf32, #tpu.memory_space<vmem>>, vector<1x128x384xf32>
    %22 = vector.shape_cast %21 : vector<1x128x384xf32> to vector<128x384xf32>
    %cst_23 = arith.constant dense<0.000000e+00> : vector<64x384xf32>
    %23 = tpu.matmul %20, %22, %cst_23 {dimension_numbers = #tpu.dot_dimension_numbers<[1], [0], [0], [1], [0, 0, 1, 1], [], []>} : vector<64x128xf32>, vector<128x384xf32>, vector<64x384xf32> -> vector<64x384xf32>
    %24 = arith.addf %18, %23 : vector<64x384xf32>
    %c0_24 = arith.constant 0 : index
    %c0_25 = arith.constant 0 : index
    %25 = vector.load %arg3[%c0_24, %c0_25] : memref<1x384xf32, #tpu.memory_space<vmem>>, vector<1x384xf32>
    %26 = vector.broadcast %25 : vector<1x384xf32> to vector<64x384xf32>
    %27 = arith.addf %24, %26 : vector<64x384xf32>
    %cst_26 = arith.constant 0.000000e+00 : f32
    %28 = vector.broadcast %cst_26 : f32 to vector<64x384xf32>
    %29 = arith.maximumf %27, %28 : vector<64x384xf32>
    %30 = vector.shape_cast %29 : vector<64x384xf32> to vector<8x8x384xf32>
    %31 = tpu.iota {dimensions = array<i32: 0>} : vector<8x384xi32>
    %32 = tpu.iota {dimensions = array<i32: 1>} : vector<8x384xi32>
    %false = arith.constant false
    %33 = vector.broadcast %false : i1 to vector<8x384xi1>
    %c0_i32 = arith.constant 0 : i32
    %34 = vector.broadcast %c0_i32 : i32 to vector<8x384xi32>
    %35 = arith.cmpi sge, %32, %34 : vector<8x384xi32>
    %c128_i32 = arith.constant 128 : i32
    %36 = vector.broadcast %c128_i32 : i32 to vector<8x384xi32>
    %37 = arith.cmpi slt, %32, %36 : vector<8x384xi32>
    %38 = arith.andi %35, %37 : vector<8x384xi1>
    %c7_i32 = arith.constant 7 : i32
    %39 = vector.broadcast %c7_i32 : i32 to vector<8x384xi32>
    %40 = arith.cmpi slt, %31, %39 : vector<8x384xi32>
    %41 = arith.andi %38, %40 : vector<8x384xi1>
    %42 = arith.ori %33, %41 : vector<8x384xi1>
    %c128_i32_27 = arith.constant 128 : i32
    %43 = vector.broadcast %c128_i32_27 : i32 to vector<8x384xi32>
    %44 = arith.cmpi sge, %32, %43 : vector<8x384xi32>
    %c256_i32 = arith.constant 256 : i32
    %45 = vector.broadcast %c256_i32 : i32 to vector<8x384xi32>
    %46 = arith.cmpi slt, %32, %45 : vector<8x384xi32>
    %47 = arith.andi %44, %46 : vector<8x384xi1>
    %c6_i32 = arith.constant 6 : i32
    %48 = vector.broadcast %c6_i32 : i32 to vector<8x384xi32>
    %49 = arith.cmpi slt, %31, %48 : vector<8x384xi32>
    %50 = arith.andi %47, %49 : vector<8x384xi1>
    %51 = arith.ori %42, %50 : vector<8x384xi1>
    %c256_i32_28 = arith.constant 256 : i32
    %52 = vector.broadcast %c256_i32_28 : i32 to vector<8x384xi32>
    %53 = arith.cmpi sge, %32, %52 : vector<8x384xi32>
    %c384_i32 = arith.constant 384 : i32
    %54 = vector.broadcast %c384_i32 : i32 to vector<8x384xi32>
    %55 = arith.cmpi slt, %32, %54 : vector<8x384xi32>
    %56 = arith.andi %53, %55 : vector<8x384xi1>
    %c5_i32 = arith.constant 5 : i32
    %57 = vector.broadcast %c5_i32 : i32 to vector<8x384xi32>
    %58 = arith.cmpi slt, %31, %57 : vector<8x384xi32>
    %59 = arith.andi %56, %58 : vector<8x384xi1>
    %60 = arith.ori %51, %59 : vector<8x384xi1>
    %61 = vector.shape_cast %60 : vector<8x384xi1> to vector<1x8x384xi1>
    %cst_29 = arith.constant 0.000000e+00 : f32
    %62 = vector.shape_cast %61 : vector<1x8x384xi1> to vector<1x8x384xi1>
    %63 = vector.broadcast %62 : vector<1x8x384xi1> to vector<8x8x384xi1>
    %64 = vector.broadcast %cst_29 : f32 to vector<8x8x384xf32>
    %65 = arith.select %63, %30, %64 : vector<8x8x384xi1>, vector<8x8x384xf32>
    %cst_30 = arith.constant dense<0xFF800000> : vector<8x384xf32>
    %66 = vector.multi_reduction <maximumf>, %65, %cst_30 [1] : vector<8x8x384xf32> to vector<8x384xf32>
    %c0_31 = arith.constant 0 : index
    %c0_32 = arith.constant 0 : index
    %67 = vector.load %arg4[%c0_31, %c0_32] : memref<384x128xf32, #tpu.memory_space<vmem>>, vector<384x128xf32>
    %cst_33 = arith.constant dense<0.000000e+00> : vector<8x128xf32>
    %68 = tpu.matmul %66, %67, %cst_33 {dimension_numbers = #tpu.dot_dimension_numbers<[1], [0], [0], [1], [0, 0, 1, 1], [], []>} : vector<8x384xf32>, vector<384x128xf32>, vector<8x128xf32> -> vector<8x128xf32>
    %c0_34 = arith.constant 0 : index
    %c0_35 = arith.constant 0 : index
    %69 = vector.load %arg5[%c0_34, %c0_35] : memref<1x128xf32, #tpu.memory_space<vmem>>, vector<1x128xf32>
    %70 = vector.broadcast %69 : vector<1x128xf32> to vector<8x128xf32>
    %71 = arith.addf %68, %70 : vector<8x128xf32>
    %c0_36 = arith.constant 0 : index
    %c0_37 = arith.constant 0 : index
    %72 = vector.load %arg6[%c0_36, %c0_37] : memref<8x128xf32, #tpu.memory_space<vmem>>, vector<8x128xf32>
    tpu.vector_store %arg6[%c0_36, %c0_37], %71 {strides = array<i32>} : memref<8x128xf32, #tpu.memory_space<vmem>>, vector<8x128xf32>,
    return
  }
  func.func @transform_0(%arg0: i32) -> (i32, i32, i32) {
    %c0_i32 = arith.constant 0 : i32
    %c0_i32_0 = arith.constant 0 : i32
    %c0_i32_1 = arith.constant 0 : i32
    return %arg0, %c0_i32, %c0_i32_0 : i32, i32, i32
  }
  func.func @transform_1(%arg0: i32) -> (i32, i32, i32) {
    %c0_i32 = arith.constant 0 : i32
    %c0_i32_0 = arith.constant 0 : i32
    %c0_i32_1 = arith.constant 0 : i32
    %c0_i32_2 = arith.constant 0 : i32
    return %c0_i32, %c0_i32_0, %c0_i32_1 : i32, i32, i32
  }
  func.func @transform_2(%arg0: i32) -> (i32, i32) {
    %c0_i32 = arith.constant 0 : i32
    %c0_i32_0 = arith.constant 0 : i32
    %c0_i32_1 = arith.constant 0 : i32
    return %c0_i32, %c0_i32_0 : i32, i32
  }
  func.func @transform_3(%arg0: i32) -> (i32, i32) {
    %c0_i32 = arith.constant 0 : i32
    %c0_i32_0 = arith.constant 0 : i32
    %c0_i32_1 = arith.constant 0 : i32
    return %c0_i32, %c0_i32_0 : i32, i32
  }
  func.func @transform_4(%arg0: i32) -> (i32, i32) {
    %c0_i32 = arith.constant 0 : i32
    %c0_i32_0 = arith.constant 0 : i32
    %c0_i32_1 = arith.constant 0 : i32
    return %c0_i32, %c0_i32_0 : i32, i32
  }
  func.func @transform_5(%arg0: i32) -> (i32, i32) {
    %c0_i32 = arith.constant 0 : i32
    %c0_i32_0 = arith.constant 0 : i32
    return %arg0, %c0_i32 : i32, i32
  }
}

</mosaic_0001>

<llo_original>
// kernel: tpu_custom_call.1
$region0: #{tpu_custom_call.1}
  #allocation0 [shape = 'u32[]', space=smem, size = 0x4, offset = 0x4, fixed_abs, tag = 'smem constant byte address 0x4 - core index']
  #allocation1 [shape = 'u32[144,128]{1,0:T(1,128)}', space=vmem, size = 0x12000, scoped, tag = 'internal scratch']
  %s0 = inlined_call_operand.hbm [shape: f32[8,16,128], index: 0, kind: input, shape index: {}]
  %s1 = inlined_call_operand.hbm [shape: f32[4,128,384], index: 1, kind: input, shape index: {}]
  %s2 = inlined_call_operand.vmem [shape: f32[1,384], index: 2, kind: input, shape index: {}]
  %s3 = inlined_call_operand.hbm [shape: f32[384,128], index: 3, kind: input, shape index: {}]
  %s4 = inlined_call_operand.vmem [shape: f32[1,128], index: 4, kind: input, shape index: {}]
  %s5 = inlined_call_operand.hbm [shape: f32[8,128], index: 5, kind: output, shape index: {}]
  %s6 = sld [smem:[#allocation0]]
  $region42: #{tpu_custom_call.1} parent=0
    _
  %s8 = ssub.s32 1, %s6
  %s9 = scalar_select 0, %s8, %s6
  $region1: #{tpu_custom_call.1} parent=0
    #allocation2 [shape = 'u8[65536]{0}', space=vmem, size = 0x10000, scoped, tag = 'input window, operand 0, single buffered']
    #allocation3 [shape = 's32[1]{0}', space=sflag, size = 0x4, scoped, tag = 'scoped memory for tpu_custom_call.1']
    #allocation4 [shape = 's32[1]{0}', space=sflag, size = 0x4, scoped, tag = 'scoped memory for tpu_custom_call.1']
    #allocation5 [shape = 'u8[786432]{0}', space=vmem, size = 0xc0000, scoped, tag = 'input window, operand 1, single buffered']
    #allocation6 [shape = 's32[1]{0}', space=sflag, size = 0x4, scoped, tag = 'scoped memory for tpu_custom_call.1']
    #allocation7 [shape = 'u8[196608]{0}', space=vmem, size = 0x30000, scoped, tag = 'input window, operand 3, single buffered']
    #allocation8 [shape = 'u8[4096]{0}', space=vmem, size = 0x1000, scoped, tag = 'output window, operand 0, single buffered']
    %10 = vsyncpa [#allocation3], 0
    %11 = vsyncpa [#allocation6], 0
    %12 = vsyncpa [#allocation4], 0
    // Predicated region
    $region2: #{tpu_custom_call.1} parent=1 // pred_check
      _
    $region3: #{tpu_custom_call.1} parent=1 // pred_check_branch
      %14 = sbr.rel (0) target = $region5
    $region4: #{tpu_custom_call.1} parent=1 // pred_region
      %s16 = ssub.s32 2048, 2048
      %17 = vsyncadd [#allocation3], %s16
      %s18 = sshll.u32 [#allocation2], 4
      %s19 = int_to_ptr.vmem [resolvable:$true] %s18
      %24 = dma.hbm_to_vmem [thread:$0]  %s0, 2048, %s19, [#allocation3], 128, 128, 8
    $region5: #{tpu_custom_call.1} parent=1 // pred_fallthru
      _
    // Predicated region
    $region6: #{tpu_custom_call.1} parent=1 // pred_check
      _
    $region7: #{tpu_custom_call.1} parent=1 // pred_check_branch
      %26 = sbr.rel (0) target = $region9
    $region8: #{tpu_custom_call.1} parent=1 // pred_region
      %s28 = ssub.s32 24576, 24576
      %29 = vsyncadd [#allocation6], %s28
      %s30 = sshll.u32 [#allocation5], 4
      %s31 = int_to_ptr.vmem [resolvable:$true] %s30
      %36 = dma.hbm_to_vmem [thread:$0]  %s1, 24576, %s31, [#allocation6], 384, 384, 24
    $region9: #{tpu_custom_call.1} parent=1 // pred_fallthru
      _
    // Predicated region
    $region10: #{tpu_custom_call.1} parent=1 // pred_check
      _
    $region11: #{tpu_custom_call.1} parent=1 // pred_check_branch
      %38 = sbr.rel (0) target = $region13
    $region12: #{tpu_custom_call.1} parent=1 // pred_region
      _
    $region13: #{tpu_custom_call.1} parent=1 // pred_fallthru
      _
    // Predicated region
    $region14: #{tpu_custom_call.1} parent=1 // pred_check
      _
    $region15: #{tpu_custom_call.1} parent=1 // pred_check_branch
      %40 = sbr.rel (0) target = $region17
    $region16: #{tpu_custom_call.1} parent=1 // pred_region
      %s42 = ssub.s32 6144, 6144
      %43 = vsyncadd [#allocation6], %s42
      %s44 = sshll.u32 [#allocation7], 4
      %s45 = int_to_ptr.vmem [resolvable:$true] %s44
      %50 = dma.hbm_to_vmem [thread:$0]  %s3, 6144, %s45, [#allocation6], 128, 128, 8
    $region17: #{tpu_custom_call.1} parent=1 // pred_fallthru
      _
    // Predicated region
    $region18: #{tpu_custom_call.1} parent=1 // pred_check
      _
    $region19: #{tpu_custom_call.1} parent=1 // pred_check_branch
      %52 = sbr.rel (0) target = $region21
    $region20: #{tpu_custom_call.1} parent=1 // pred_region
      _
    $region21: #{tpu_custom_call.1} parent=1 // pred_fallthru
      _
    // Predicated region
    $region22: #{tpu_custom_call.1} parent=1 // pred_check
      _
    $region23: #{tpu_custom_call.1} parent=1 // pred_check_branch
      %54 = sbr.rel (0) target = $region25
    $region24: #{tpu_custom_call.1} parent=1 // pred_region
      %55 = dma.done [#allocation3], 2048
    $region25: #{tpu_custom_call.1} parent=1 // pred_fallthru
      _
    // Predicated region
    $region26: #{tpu_custom_call.1} parent=1 // pred_check
      _
    $region27: #{tpu_custom_call.1} parent=1 // pred_check_branch
      %57 = sbr.rel (0) target = $region29
    $region28: #{tpu_custom_call.1} parent=1 // pred_region
      %58 = dma.done [#allocation6], 24576
    $region29: #{tpu_custom_call.1} parent=1 // pred_fallthru
      _
    // Predicated region
    $region30: #{tpu_custom_call.1} parent=1 // pred_check
      _
    $region31: #{tpu_custom_call.1} parent=1 // pred_check_branch
      %60 = sbr.rel (0) target = $region33
    $region32: #{tpu_custom_call.1} parent=1 // pred_region
      %61 = dma.done [#allocation6], 6144
    $region33: #{tpu_custom_call.1} parent=1 // pred_fallthru
      _
    %v62 = vld [vmem:[#allocation2] sm:$0xff]
    %v63 = vld [vmem:[#allocation2 + $0x10] sm:$0xff]
    %v64 = vld [vmem:[#allocation2 + $0x20] sm:$0xff]
    %v65 = vld [vmem:[#allocation2 + $0x30] sm:$0xff]
    %v66 = vld [vmem:[#allocation2 + $0x40] sm:$0xff]
    %v67 = vld [vmem:[#allocation2 + $0x50] sm:$0xff]
    %v68 = vld [vmem:[#allocation2 + $0x60] sm:$0xff]
    %v69 = vld [vmem:[#allocation2 + $0x70] sm:$0xff]
    %v70 = vld [vmem:[#allocation5] sm:$0xff]
    %v71 = vld [vmem:[#allocation5 + $0x8] sm:$0xff]
    %v72 = vld [vmem:[#allocation5 + $0x10] sm:$0xff]
    %v73 = vld [vmem:[#allocation5 + $0x18] sm:$0xff]
    %v74 = vld [vmem:[#allocation5 + $0x20] sm:$0xff]
    %v75 = vld [vmem:[#allocation5 + $0x28] sm:$0xff]
    %v76 = vld [vmem:[#allocation5 + $0x30] sm:$0xff]
    %v77 = vld [vmem:[#allocation5 + $0x38] sm:$0xff]
    %v78 = vld [vmem:[#allocation5 + $0x40] sm:$0xff]
    %v79 = vld [vmem:[#allocation5 + $0x48] sm:$0xff]
    %v80 = vld [vmem:[#allocation5 + $0x50] sm:$0xff]
    %v81 = vld [vmem:[#allocation5 + $0x58] sm:$0xff]
    %v82 = vld [vmem:[#allocation5 + $0x60] sm:$0xff]
    %v83 = vld [vmem:[#allocation5 + $0x68] sm:$0xff]
    %v84 = vld [vmem:[#allocation5 + $0x70] sm:$0xff]
    %v85 = vld [vmem:[#allocation5 + $0x78] sm:$0xff]
    %v86 = vld [vmem:[#allocation5 + $0x80] sm:$0xff]
    %v87 = vld [vmem:[#allocation5 + $0x88] sm:$0xff]
    %v88 = vld [vmem:[#allocation5 + $0x90] sm:$0xff]
    %v89 = vld [vmem:[#allocation5 + $0x98] sm:$0xff]
    %v90 = vld [vmem:[#allocation5 + $0xa0] sm:$0xff]
    %v91 = vld [vmem:[#allocation5 + $0xa8] sm:$0xff]
    %v92 = vld [vmem:[#allocation5 + $0xb0] sm:$0xff]
    %v93 = vld [vmem:[#allocation5 + $0xb8] sm:$0xff]
    %v94 = vld [vmem:[#allocation5 + $0xc0] sm:$0xff]
    %v95 = vld [vmem:[#allocation5 + $0xc8] sm:$0xff]
    %v96 = vld [vmem:[#allocation5 + $0xd0] sm:$0xff]
    %v97 = vld [vmem:[#allocation5 + $0xd8] sm:$0xff]
    %v98 = vld [vmem:[#allocation5 + $0xe0] sm:$0xff]
    %v99 = vld [vmem:[#allocation5 + $0xe8] sm:$0xff]
    %v100 = vld [vmem:[#allocation5 + $0xf0] sm:$0xff]
    %v101 = vld [vmem:[#allocation5 + $0xf8] sm:$0xff]
    %v102 = vld [vmem:[#allocation5 + $0x100] sm:$0xff]
    %v103 = vld [vmem:[#allocation5 + $0x108] sm:$0xff]
    %v104 = vld [vmem:[#allocation5 + $0x110] sm:$0xff]
    %v105 = vld [vmem:[#allocation5 + $0x118] sm:$0xff]
    %v106 = vld [vmem:[#allocation5 + $0x120] sm:$0xff]
    %v107 = vld [vmem:[#allocation5 + $0x128] sm:$0xff]
    %v108 = vld [vmem:[#allocation5 + $0x130] sm:$0xff]
    %v109 = vld [vmem:[#allocation5 + $0x138] sm:$0xff]
    %v110 = vld [vmem:[#allocation5 + $0x140] sm:$0xff]
    %v111 = vld [vmem:[#allocation5 + $0x148] sm:$0xff]
    %v112 = vld [vmem:[#allocation5 + $0x150] sm:$0xff]
    %v113 = vld [vmem:[#allocation5 + $0x158] sm:$0xff]
    %v114 = vld [vmem:[#allocation5 + $0x160] sm:$0xff]
    %v115 = vld [vmem:[#allocation5 + $0x168] sm:$0xff]
    %v116 = vld [vmem:[#allocation5 + $0x170] sm:$0xff]
    %v117 = vld [vmem:[#allocation5 + $0x178] sm:$0xff]
    %v118 = vld [vmem:[#allocation2 + $0x1] sm:$0xff]
    %v119 = vld [vmem:[#allocation2 + $0x11] sm:$0xff]
    %v120 = vld [vmem:[#allocation2 + $0x21] sm:$0xff]
    %v121 = vld [vmem:[#allocation2 + $0x31] sm:$0xff]
    %v122 = vld [vmem:[#allocation2 + $0x41] sm:$0xff]
    %v123 = vld [vmem:[#allocation2 + $0x51] sm:$0xff]
    %v124 = vld [vmem:[#allocation2 + $0x61] sm:$0xff]
    %v125 = vld [vmem:[#allocation2 + $0x71] sm:$0xff]
    %s126 = scalar_lea.vmem [#allocation5], 384
    %v127 = vld [vmem:[%s126] sm:$0xff]
    %v128 = vld [vmem:[%s126 + $0x8] sm:$0xff]
    %v129 = vld [vmem:[%s126 + $0x10] sm:$0xff]
    %v130 = vld [vmem:[%s126 + $0x18] sm:$0xff]
    %v131 = vld [vmem:[%s126 + $0x20] sm:$0xff]
    %v132 = vld [vmem:[%s126 + $0x28] sm:$0xff]
    %v133 = vld [vmem:[%s126 + $0x30] sm:$0xff]
    %v134 = vld [vmem:[%s126 + $0x38] sm:$0xff]
    %v135 = vld [vmem:[%s126 + $0x40] sm:$0xff]
    %v136 = vld [vmem:[%s126 + $0x48] sm:$0xff]
    %v137 = vld [vmem:[%s126 + $0x50] sm:$0xff]
    %v138 = vld [vmem:[%s126 + $0x58] sm:$0xff]
    %v139 = vld [vmem:[%s126 + $0x60] sm:$0xff]
    %v140 = vld [vmem:[%s126 + $0x68] sm:$0xff]
    %v141 = vld [vmem:[%s126 + $0x70] sm:$0xff]
    %v142 = vld [vmem:[%s126 + $0x78] sm:$0xff]
    %v143 = vld [vmem:[%s126 + $0x80] sm:$0xff]
    %v144 = vld [vmem:[%s126 + $0x88] sm:$0xff]
    %v145 = vld [vmem:[%s126 + $0x90] sm:$0xff]
    %v146 = vld [vmem:[%s126 + $0x98] sm:$0xff]
    %v147 = vld [vmem:[%s126 + $0xa0] sm:$0xff]
    %v148 = vld [vmem:[%s126 + $0xa8] sm:$0xff]
    %v149 = vld [vmem:[%s126 + $0xb0] sm:$0xff]
    %v150 = vld [vmem:[%s126 + $0xb8] sm:$0xff]
    %v151 = vld [vmem:[%s126 + $0xc0] sm:$0xff]
    %v152 = vld [vmem:[%s126 + $0xc8] sm:$0xff]
    %v153 = vld [vmem:[%s126 + $0xd0] sm:$0xff]
    %v154 = vld [vmem:[%s126 + $0xd8] sm:$0xff]
    %v155 = vld [vmem:[%s126 + $0xe0] sm:$0xff]
    %v156 = vld [vmem:[%s126 + $0xe8] sm:$0xff]
    %v157 = vld [vmem:[%s126 + $0xf0] sm:$0xff]
    %v158 = vld [vmem:[%s126 + $0xf8] sm:$0xff]
    %v159 = vld [vmem:[%s126 + $0x100] sm:$0xff]
    %v160 = vld [vmem:[%s126 + $0x108] sm:$0xff]
    %v161 = vld [vmem:[%s126 + $0x110] sm:$0xff]
    %v162 = vld [vmem:[%s126 + $0x118] sm:$0xff]
    %v163 = vld [vmem:[%s126 + $0x120] sm:$0xff]
    %v164 = vld [vmem:[%s126 + $0x128] sm:$0xff]
    %v165 = vld [vmem:[%s126 + $0x130] sm:$0xff]
    %v166 = vld [vmem:[%s126 + $0x138] sm:$0xff]
    %v167 = vld [vmem:[%s126 + $0x140] sm:$0xff]
    %v168 = vld [vmem:[%s126 + $0x148] sm:$0xff]
    %v169 = vld [vmem:[%s126 + $0x150] sm:$0xff]
    %v170 = vld [vmem:[%s126 + $0x158] sm:$0xff]
    %v171 = vld [vmem:[%s126 + $0x160] sm:$0xff]
    %v172 = vld [vmem:[%s126 + $0x168] sm:$0xff]
    %v173 = vld [vmem:[%s126 + $0x170] sm:$0xff]
    %v174 = vld [vmem:[%s126 + $0x178] sm:$0xff]
    %175 = vmatprep.subr.mxu0 %v173
    %176 = vmatpush1.msra.mxu0 %v172
    %177 = vmatprep.subr.mxu0 %v170
    %178 = vmatpush1.msra.mxu0 %v169
    %179 = vmatprep.subr.mxu0 %v167
    %180 = vmatpush1.msra.mxu0 %v166
    %181 = vmatprep.subr.mxu0 %v164
    %182 = vmatpush1.msra.mxu0 %v163
    %183 = vmatprep.subr.mxu0 %v161
    %184 = vmatpush1.msra.mxu0 %v160
    %185 = vmatprep.subr.mxu0 %v158
    %186 = vmatpush1.msra.mxu0 %v157
    %187 = vmatprep.subr.mxu0 %v155
    %188 = vmatpush1.msra.mxu0 %v154
    %189 = vmatprep.subr.mxu0 %v152
    %190 = vmatpush1.msra.mxu0 %v151
    %191 = vmatprep.subr.mxu0 %v149
    %192 = vmatpush1.msra.mxu0 %v148
    %193 = vmatprep.subr.mxu0 %v146
    %194 = vmatpush1.msra.mxu0 %v145
    %195 = vmatprep.subr.mxu0 %v143
    %196 = vmatpush1.msra.mxu0 %v142
    %197 = vmatprep.subr.mxu0 %v140
    %198 = vmatpush1.msra.mxu0 %v139
    %199 = vmatprep.subr.mxu0 %v137
    %200 = vmatpush1.msra.mxu0 %v136
    %201 = vmatprep.subr.mxu0 %v134
    %202 = vmatpush1.msra.mxu0 %v133
    %203 = vmatprep.subr.mxu0 %v131
    %204 = vmatpush1.msra.mxu0 %v130
    %205 = vmatprep.subr.mxu0 %v128
    %206 = vmatpush1.msra.mxu0 %v127
    %207 = vmatprep.subr.mxu0 0.0
    %208 = vmatpush2.msra.mxu0 0.0
    %209 = vmatprep.subr.mxu0 0.0
    %210 = vmatpush2.msra.mxu0 0.0
    %211 = vmatprep.subr.mxu0 0.0
    %212 = vmatpush2.msra.mxu0 0.0
    %213 = vmatprep.subr.mxu0 0.0
    %214 = vmatpush2.msra.mxu0 0.0
    %215 = vmatprep.subr.mxu0 0.0
    %216 = vmatpush2.msra.mxu0 0.0
    %217 = vmatprep.subr.mxu0 0.0
    %218 = vmatpush2.msra.mxu0 0.0
    %219 = vmatprep.subr.mxu0 0.0
    %220 = vmatpush2.msra.mxu0 0.0
    %221 = vmatprep.subr.mxu0 0.0
    %222 = vmatpush2.msra.mxu0 0.0
    %223 = vmatprep.subr.mxu0 0.0
    %224 = vmatpush2.msra.mxu0 0.0
    %225 = vmatprep.subr.mxu0 0.0
    %226 = vmatpush2.msra.mxu0 0.0
    %227 = vmatprep.subr.mxu0 0.0
    %228 = vmatpush2.msra.mxu0 0.0
    %229 = vmatprep.subr.mxu0 0.0
    %230 = vmatpush2.msra.mxu0 0.0
    %231 = vmatprep.subr.mxu0 0.0
    %232 = vmatpush2.msra.mxu0 0.0
    %233 = vmatprep.subr.mxu0 0.0
    %234 = vmatpush2.msra.mxu0 0.0
    %235 = vmatprep.subr.mxu0 0.0
    %236 = vmatpush2.msra.mxu0 0.0
    %237 = vmatprep.subr.mxu0 0.0
    %238 = vmatpush2.msra.mxu0 0.0
    %239 = vmatprep.mubr.f32.mxu0 0.0
    %240 = vmatmul.mubr.f32.gmra.mxu0 %v118
    %v241 = vpop.f32.mrf.mxu0
    %v242 = vadd.f32 0.0, %v241
    %v243 = vpop.f32.mrf.mxu0
    %v244 = vadd.f32 0.0, %v243
    %245 = vmatprep.mubr.f32.mxu0 0.0
    %246 = vmatmul.mubr.f32.gmra.mxu0 %v119
    %v247 = vpop.f32.mrf.mxu0
    %v248 = vadd.f32 0.0, %v247
    %v249 = vpop.f32.mrf.mxu0
    %v250 = vadd.f32 0.0, %v249
    %251 = vmatprep.mubr.f32.mxu0 0.0
    %252 = vmatmul.mubr.f32.gmra.mxu0 %v120
    %v253 = vpop.f32.mrf.mxu0
    %v254 = vadd.f32 0.0, %v253
    %v255 = vpop.f32.mrf.mxu0
    %v256 = vadd.f32 0.0, %v255
    %257 = vmatprep.mubr.f32.mxu0 0.0
    %258 = vmatmul.mubr.f32.gmra.mxu0 %v121
    %v259 = vpop.f32.mrf.mxu0
    %v260 = vadd.f32 0.0, %v259
    %v261 = vpop.f32.mrf.mxu0
    %v262 = vadd.f32 0.0, %v261
    %263 = vmatprep.mubr.f32.mxu0 0.0
    %264 = vmatmul.mubr.f32.gmra.mxu0 %v122
    %v265 = vpop.f32.mrf.mxu0
    %v266 = vadd.f32 0.0, %v265
    %v267 = vpop.f32.mrf.mxu0
    %v268 = vadd.f32 0.0, %v267
    %269 = vmatprep.mubr.f32.mxu0 0.0
    %270 = vmatmul.mubr.f32.gmra.mxu0 %v123
    %v271 = vpop.f32.mrf.mxu0
    %v272 = vadd.f32 0.0, %v271
    %v273 = vpop.f32.mrf.mxu0
    %v274 = vadd.f32 0.0, %v273
    %275 = vmatprep.mubr.f32.mxu0 0.0
    %276 = vmatmul.mubr.f32.gmra.mxu0 %v124
    %v277 = vpop.f32.mrf.mxu0
    %v278 = vadd.f32 0.0, %v277
    %v279 = vpop.f32.mrf.mxu0
    %v280 = vadd.f32 0.0, %v279
    %281 = vmatprep.mubr.f32.mxu0 0.0
    %282 = vmatmul.mubr.f32.gmra.mxu0 %v125
    %v283 = vpop.f32.mrf.mxu0
    %v284 = vadd.f32 0.0, %v283
    %v285 = vpop.f32.mrf.mxu0
    %v286 = vadd.f32 0.0, %v285
    %287 = vdwg.mxu0
    %288 = vmatprep.subr.mxu0 0.0
    %289 = vmatpush1.msra.mxu0 %v174
    %290 = vmatprep.subr.mxu0 0.0
    %291 = vmatpush1.msra.mxu0 %v171
    %292 = vmatprep.subr.mxu0 0.0
    %293 = vmatpush1.msra.mxu0 %v168
    %294 = vmatprep.subr.mxu0 0.0
    %295 = vmatpush1.msra.mxu0 %v165
    %296 = vmatprep.subr.mxu0 0.0
    %297 = vmatpush1.msra.mxu0 %v162
    %298 = vmatprep.subr.mxu0 0.0
    %299 = vmatpush1.msra.mxu0 %v159
    %300 = vmatprep.subr.mxu0 0.0
    %301 = vmatpush1.msra.mxu0 %v156
    %302 = vmatprep.subr.mxu0 0.0
    %303 = vmatpush1.msra.mxu0 %v153
    %304 = vmatprep.subr.mxu0 0.0
    %305 = vmatpush1.msra.mxu0 %v150
    %306 = vmatprep.subr.mxu0 0.0
    %307 = vmatpush1.msra.mxu0 %v147
    %308 = vmatprep.subr.mxu0 0.0
    %309 = vmatpush1.msra.mxu0 %v144
    %310 = vmatprep.subr.mxu0 0.0
    %311 = vmatpush1.msra.mxu0 %v141
    %312 = vmatprep.subr.mxu0 0.0
    %313 = vmatpush1.msra.mxu0 %v138
    %314 = vmatprep.subr.mxu0 0.0
    %315 = vmatpush1.msra.mxu0 %v135
    %316 = vmatprep.subr.mxu0 0.0
    %317 = vmatpush1.msra.mxu0 %v132
    %318 = vmatprep.subr.mxu0 0.0
    %319 = vmatpush1.msra.mxu0 %v129
    %320 = vmatprep.subr.mxu0 0.0
    %321 = vmatpush2.msra.mxu0 0.0
    %322 = vmatprep.subr.mxu0 0.0
    %323 = vmatpush2.msra.mxu0 0.0
    %324 = vmatprep.subr.mxu0 0.0
    %325 = vmatpush2.msra.mxu0 0.0
    %326 = vmatprep.subr.mxu0 0.0
    %327 = vmatpush2.msra.mxu0 0.0
    %328 = vmatprep.subr.mxu0 0.0
    %329 = vmatpush2.msra.mxu0 0.0
    %330 = vmatprep.subr.mxu0 0.0
    %331 = vmatpush2.msra.mxu0 0.0
    %332 = vmatprep.subr.mxu0 0.0
    %333 = vmatpush2.msra.mxu0 0.0
    %334 = vmatprep.subr.mxu0 0.0
    %335 = vmatpush2.msra.mxu0 0.0
    %336 = vmatprep.subr.mxu0 0.0
    %337 = vmatpush2.msra.mxu0 0.0
    %338 = vmatprep.subr.mxu0 0.0
    %339 = vmatpush2.msra.mxu0 0.0
    %340 = vmatprep.subr.mxu0 0.0
    %341 = vmatpush2.msra.mxu0 0.0
    %342 = vmatprep.subr.mxu0 0.0
    %343 = vmatpush2.msra.mxu0 0.0
    %344 = vmatprep.subr.mxu0 0.0
    %345 = vmatpush2.msra.mxu0 0.0
    %346 = vmatprep.subr.mxu0 0.0
    %347 = vmatpush2.msra.mxu0 0.0
    %348 = vmatprep.subr.mxu0 0.0
    %349 = vmatpush2.msra.mxu0 0.0
    %350 = vmatprep.subr.mxu0 0.0
    %351 = vmatpush2.msra.mxu0 0.0
    %352 = vmatprep.mubr.f32.mxu0 0.0
    %353 = vmatmul.mubr.f32.gmra.mxu0 %v118
    %v354 = vpop.f32.mrf.mxu0
    %v355 = vadd.f32 0.0, %v354
    %v356 = vpop.f32.mrf.mxu0
    %357 = vmatprep.mubr.f32.mxu0 0.0
    %358 = vmatmul.mubr.f32.gmra.mxu0 %v119
    %v359 = vpop.f32.mrf.mxu0
    %v360 = vadd.f32 0.0, %v359
    %v361 = vpop.f32.mrf.mxu0
    %362 = vmatprep.mubr.f32.mxu0 0.0
    %363 = vmatmul.mubr.f32.gmra.mxu0 %v120
    %v364 = vpop.f32.mrf.mxu0
    %v365 = vadd.f32 0.0, %v364
    %v366 = vpop.f32.mrf.mxu0
    %367 = vmatprep.mubr.f32.mxu0 0.0
    %368 = vmatmul.mubr.f32.gmra.mxu0 %v121
    %v369 = vpop.f32.mrf.mxu0
    %v370 = vadd.f32 0.0, %v369
    %v371 = vpop.f32.mrf.mxu0
    %372 = vmatprep.mubr.f32.mxu0 0.0
    %373 = vmatmul.mubr.f32.gmra.mxu0 %v122
    %v374 = vpop.f32.mrf.mxu0
    %v375 = vadd.f32 0.0, %v374
    %v376 = vpop.f32.mrf.mxu0
    %377 = vmatprep.mubr.f32.mxu0 0.0
    %378 = vmatmul.mubr.f32.gmra.mxu0 %v123
    %v379 = vpop.f32.mrf.mxu0
    %v380 = vadd.f32 0.0, %v379
    %v381 = vpop.f32.mrf.mxu0
    %382 = vmatprep.mubr.f32.mxu0 0.0
    %383 = vmatmul.mubr.f32.gmra.mxu0 %v124
    %v384 = vpop.f32.mrf.mxu0
    %v385 = vadd.f32 0.0, %v384
    %v386 = vpop.f32.mrf.mxu0
    %387 = vmatprep.mubr.f32.mxu0 0.0
    %388 = vmatmul.mubr.f32.gmra.mxu0 %v125
    %v389 = vpop.f32.mrf.mxu0
    %v390 = vadd.f32 0.0, %v389
    %v391 = vpop.f32.mrf.mxu0
    %392 = vdwg.mxu0
    %393 = vmatprep.subr.mxu0 %v116
    %394 = vmatpush1.msra.mxu0 %v115
    %395 = vmatprep.subr.mxu0 %v113
    %396 = vmatpush1.msra.mxu0 %v112
    %397 = vmatprep.subr.mxu0 %v110
    %398 = vmatpush1.msra.mxu0 %v109
    %399 = vmatprep.subr.mxu0 %v107
    %400 = vmatpush1.msra.mxu0 %v106
    %401 = vmatprep.subr.mxu0 %v104
    %402 = vmatpush1.msra.mxu0 %v103
    %403 = vmatprep.subr.mxu0 %v101
    %404 = vmatpush1.msra.mxu0 %v100
    %405 = vmatprep.subr.mxu0 %v98
    %406 = vmatpush1.msra.mxu0 %v97
    %407 = vmatprep.subr.mxu0 %v95
    %408 = vmatpush1.msra.mxu0 %v94
    %409 = vmatprep.subr.mxu0 %v92
    %410 = vmatpush1.msra.mxu0 %v91
    %411 = vmatprep.subr.mxu0 %v89
    %412 = vmatpush1.msra.mxu0 %v88
    %413 = vmatprep.subr.mxu0 %v86
    %414 = vmatpush1.msra.mxu0 %v85
    %415 = vmatprep.subr.mxu0 %v83
    %416 = vmatpush1.msra.mxu0 %v82
    %417 = vmatprep.subr.mxu0 %v80
    %418 = vmatpush1.msra.mxu0 %v79
    %419 = vmatprep.subr.mxu0 %v77
    %420 = vmatpush1.msra.mxu0 %v76
    %421 = vmatprep.subr.mxu0 %v74
    %422 = vmatpush1.msra.mxu0 %v73
    %423 = vmatprep.subr.mxu0 %v71
    %424 = vmatpush1.msra.mxu0 %v70
    %425 = vmatprep.subr.mxu0 0.0
    %426 = vmatpush2.msra.mxu0 0.0
    %427 = vmatprep.subr.mxu0 0.0
    %428 = vmatpush2.msra.mxu0 0.0
    %429 = vmatprep.subr.mxu0 0.0
    %430 = vmatpush2.msra.mxu0 0.0
    %431 = vmatprep.subr.mxu0 0.0
    %432 = vmatpush2.msra.mxu0 0.0
    %433 = vmatprep.subr.mxu0 0.0
    %434 = vmatpush2.msra.mxu0 0.0
    %435 = vmatprep.subr.mxu0 0.0
    %436 = vmatpush2.msra.mxu0 0.0
    %437 = vmatprep.subr.mxu0 0.0
    %438 = vmatpush2.msra.mxu0 0.0
    %439 = vmatprep.subr.mxu0 0.0
    %440 = vmatpush2.msra.mxu0 0.0
    %441 = vmatprep.subr.mxu0 0.0
    %442 = vmatpush2.msra.mxu0 0.0
    %443 = vmatprep.subr.mxu0 0.0
    %444 = vmatpush2.msra.mxu0 0.0
    %445 = vmatprep.subr.mxu0 0.0
    %446 = vmatpush2.msra.mxu0 0.0
    %447 = vmatprep.subr.mxu0 0.0
    %448 = vmatpush2.msra.mxu0 0.0
    %449 = vmatprep.subr.mxu0 0.0
    %450 = vmatpush2.msra.mxu0 0.0
    %451 = vmatprep.subr.mxu0 0.0
    %452 = vmatpush2.msra.mxu0 0.0
    %453 = vmatprep.subr.mxu0 0.0
    %454 = vmatpush2.msra.mxu0 0.0
    %455 = vmatprep.subr.mxu0 0.0
    %456 = vmatpush2.msra.mxu0 0.0
    %457 = vmatprep.mubr.f32.mxu0 0.0
    %458 = vmatmul.mubr.f32.gmra.mxu0 %v62
    %v459 = vpop.f32.mrf.mxu0
    %v460 = vadd.f32 %v242, %v459
    %v461 = vpop.f32.mrf.mxu0
    %v462 = vadd.f32 %v244, %v461
    %463 = vmatprep.mubr.f32.mxu0 0.0
    %464 = vmatmul.mubr.f32.gmra.mxu0 %v63
    %v465 = vpop.f32.mrf.mxu0
    %v466 = vadd.f32 %v248, %v465
    %v467 = vpop.f32.mrf.mxu0
    %v468 = vadd.f32 %v250, %v467
    %469 = vmatprep.mubr.f32.mxu0 0.0
    %470 = vmatmul.mubr.f32.gmra.mxu0 %v64
    %v471 = vpop.f32.mrf.mxu0
    %v472 = vadd.f32 %v254, %v471
    %v473 = vpop.f32.mrf.mxu0
    %v474 = vadd.f32 %v256, %v473
    %475 = vmatprep.mubr.f32.mxu0 0.0
    %476 = vmatmul.mubr.f32.gmra.mxu0 %v65
    %v477 = vpop.f32.mrf.mxu0
    %v478 = vadd.f32 %v260, %v477
    %v479 = vpop.f32.mrf.mxu0
    %v480 = vadd.f32 %v262, %v479
    %481 = vmatprep.mubr.f32.mxu0 0.0
    %482 = vmatmul.mubr.f32.gmra.mxu0 %v66
    %v483 = vpop.f32.mrf.mxu0
    %v484 = vadd.f32 %v266, %v483
    %v485 = vpop.f32.mrf.mxu0
    %v486 = vadd.f32 %v268, %v485
    %487 = vmatprep.mubr.f32.mxu0 0.0
    %488 = vmatmul.mubr.f32.gmra.mxu0 %v67
    %v489 = vpop.f32.mrf.mxu0
    %v490 = vadd.f32 %v272, %v489
    %v491 = vpop.f32.mrf.mxu0
    %v492 = vadd.f32 %v274, %v491
    %493 = vmatprep.mubr.f32.mxu0 0.0
    %494 = vmatmul.mubr.f32.gmra.mxu0 %v68
    %v495 = vpop.f32.mrf.mxu0
    %v496 = vadd.f32 %v278, %v495
    %v497 = vpop.f32.mrf.mxu0
    %v498 = vadd.f32 %v280, %v497
    %499 = vmatprep.mubr.f32.mxu0 0.0
    %500 = vmatmul.mubr.f32.gmra.mxu0 %v69
    %v501 = vpop.f32.mrf.mxu0
    %v502 = vadd.f32 %v284, %v501
    %v503 = vpop.f32.mrf.mxu0
    %v504 = vadd.f32 %v286, %v503
    %505 = vdwg.mxu0
    %506 = vmatprep.subr.mxu0 0.0
    %507 = vmatpush1.msra.mxu0 %v117
    %508 = vmatprep.subr.mxu0 0.0
    %509 = vmatpush1.msra.mxu0 %v114
    %510 = vmatprep.subr.mxu0 0.0
    %511 = vmatpush1.msra.mxu0 %v111
    %512 = vmatprep.subr.mxu0 0.0
    %513 = vmatpush1.msra.mxu0 %v108
    %514 = vmatprep.subr.mxu0 0.0
    %515 = vmatpush1.msra.mxu0 %v105
    %516 = vmatprep.subr.mxu0 0.0
    %517 = vmatpush1.msra.mxu0 %v102
    %518 = vmatprep.subr.mxu0 0.0
    %519 = vmatpush1.msra.mxu0 %v99
    %520 = vmatprep.subr.mxu0 0.0
    %521 = vmatpush1.msra.mxu0 %v96
    %522 = vmatprep.subr.mxu0 0.0
    %523 = vmatpush1.msra.mxu0 %v93
    %524 = vmatprep.subr.mxu0 0.0
    %525 = vmatpush1.msra.mxu0 %v90
    %526 = vmatprep.subr.mxu0 0.0
    %527 = vmatpush1.msra.mxu0 %v87
    %528 = vmatprep.subr.mxu0 0.0
    %529 = vmatpush1.msra.mxu0 %v84
    %530 = vmatprep.subr.mxu0 0.0
    %531 = vmatpush1.msra.mxu0 %v81
    %532 = vmatprep.subr.mxu0 0.0
    %533 = vmatpush1.msra.mxu0 %v78
    %534 = vmatprep.subr.mxu0 0.0
    %535 = vmatpush1.msra.mxu0 %v75
    %536 = vmatprep.subr.mxu0 0.0
    %537 = vmatpush1.msra.mxu0 %v72
    %538 = vmatprep.subr.mxu0 0.0
    %539 = vmatpush2.msra.mxu0 0.0
    %540 = vmatprep.subr.mxu0 0.0
    %541 = vmatpush2.msra.mxu0 0.0
    %542 = vmatprep.subr.mxu0 0.0
    %543 = vmatpush2.msra.mxu0 0.0
    %544 = vmatprep.subr.mxu0 0.0
    %545 = vmatpush2.msra.mxu0 0.0
    %546 = vmatprep.subr.mxu0 0.0
    %547 = vmatpush2.msra.mxu0 0.0
    %548 = vmatprep.subr.mxu0 0.0
    %549 = vmatpush2.msra.mxu0 0.0
    %550 = vmatprep.subr.mxu0 0.0
    %551 = vmatpush2.msra.mxu0 0.0
    %552 = vmatprep.subr.mxu0 0.0
    %553 = vmatpush2.msra.mxu0 0.0
    %554 = vmatprep.subr.mxu0 0.0
    %555 = vmatpush2.msra.mxu0 0.0
    %556 = vmatprep.subr.mxu0 0.0
    %557 = vmatpush2.msra.mxu0 0.0
    %558 = vmatprep.subr.mxu0 0.0
    %559 = vmatpush2.msra.mxu0 0.0
    %560 = vmatprep.subr.mxu0 0.0
    %561 = vmatpush2.msra.mxu0 0.0
    %562 = vmatprep.subr.mxu0 0.0
    %563 = vmatpush2.msra.mxu0 0.0
    %564 = vmatprep.subr.mxu0 0.0
    %565 = vmatpush2.msra.mxu0 0.0
    %566 = vmatprep.subr.mxu0 0.0
    %567 = vmatpush2.msra.mxu0 0.0
    %568 = vmatprep.subr.mxu0 0.0
    %569 = vmatpush2.msra.mxu0 0.0
    %570 = vmatprep.mubr.f32.mxu0 0.0
    %571 = vmatmul.mubr.f32.gmra.mxu0 %v62
    %v572 = vpop.f32.mrf.mxu0
    %v573 = vadd.f32 %v355, %v572
    %v574 = vpop.f32.mrf.mxu0
    %575 = vmatprep.mubr.f32.mxu0 0.0
    %576 = vmatmul.mubr.f32.gmra.mxu0 %v63
    %v577 = vpop.f32.mrf.mxu0
    %v578 = vadd.f32 %v360, %v577
    %v579 = vpop.f32.mrf.mxu0
    %580 = vmatprep.mubr.f32.mxu0 0.0
    %581 = vmatmul.mubr.f32.gmra.mxu0 %v64
    %v582 = vpop.f32.mrf.mxu0
    %v583 = vadd.f32 %v365, %v582
    %v584 = vpop.f32.mrf.mxu0
    %585 = vmatprep.mubr.f32.mxu0 0.0
    %586 = vmatmul.mubr.f32.gmra.mxu0 %v65
    %v587 = vpop.f32.mrf.mxu0
    %v588 = vadd.f32 %v370, %v587
    %v589 = vpop.f32.mrf.mxu0
    %590 = vmatprep.mubr.f32.mxu0 0.0
    %591 = vmatmul.mubr.f32.gmra.mxu0 %v66
    %v592 = vpop.f32.mrf.mxu0
    %v593 = vadd.f32 %v375, %v592
    %v594 = vpop.f32.mrf.mxu0
    %595 = vmatprep.mubr.f32.mxu0 0.0
    %596 = vmatmul.mubr.f32.gmra.mxu0 %v67
    %v597 = vpop.f32.mrf.mxu0
    %v598 = vadd.f32 %v380, %v597
    %v599 = vpop.f32.mrf.mxu0
    %600 = vmatprep.mubr.f32.mxu0 0.0
    %601 = vmatmul.mubr.f32.gmra.mxu0 %v68
    %v602 = vpop.f32.mrf.mxu0
    %v603 = vadd.f32 %v385, %v602
    %v604 = vpop.f32.mrf.mxu0
    %605 = vmatprep.mubr.f32.mxu0 0.0
    %606 = vmatmul.mubr.f32.gmra.mxu0 %v69
    %v607 = vpop.f32.mrf.mxu0
    %v608 = vadd.f32 %v390, %v607
    %v609 = vpop.f32.mrf.mxu0
    %610 = vdwg.mxu0
    %v611 = vld [vmem:[#allocation2 + $0x2] sm:$0xff]
    %v612 = vld [vmem:[#allocation2 + $0x12] sm:$0xff]
    %v613 = vld [vmem:[#allocation2 + $0x22] sm:$0xff]
    %v614 = vld [vmem:[#allocation2 + $0x32] sm:$0xff]
    %v615 = vld [vmem:[#allocation2 + $0x42] sm:$0xff]
    %v616 = vld [vmem:[#allocation2 + $0x52] sm:$0xff]
    %v617 = vld [vmem:[#allocation2 + $0x62] sm:$0xff]
    %v618 = vld [vmem:[#allocation2 + $0x72] sm:$0xff]
    %s619 = scalar_lea.vmem [#allocation5], 768
    %v620 = vld [vmem:[%s619] sm:$0xff]
    %v621 = vld [vmem:[%s619 + $0x8] sm:$0xff]
    %v622 = vld [vmem:[%s619 + $0x10] sm:$0xff]
    %v623 = vld [vmem:[%s619 + $0x18] sm:$0xff]
    %v624 = vld [vmem:[%s619 + $0x20] sm:$0xff]
    %v625 = vld [vmem:[%s619 + $0x28] sm:$0xff]
    %v626 = vld [vmem:[%s619 + $0x30] sm:$0xff]
    %v627 = vld [vmem:[%s619 + $0x38] sm:$0xff]
    %v628 = vld [vmem:[%s619 + $0x40] sm:$0xff]
    %v629 = vld [vmem:[%s619 + $0x48] sm:$0xff]
    %v630 = vld [vmem:[%s619 + $0x50] sm:$0xff]
    %v631 = vld [vmem:[%s619 + $0x58] sm:$0xff]
    %v632 = vld [vmem:[%s619 + $0x60] sm:$0xff]
    %v633 = vld [vmem:[%s619 + $0x68] sm:$0xff]
    %v634 = vld [vmem:[%s619 + $0x70] sm:$0xff]
    %v635 = vld [vmem:[%s619 + $0x78] sm:$0xff]
    %v636 = vld [vmem:[%s619 + $0x80] sm:$0xff]
    %v637 = vld [vmem:[%s619 + $0x88] sm:$0xff]
    %v638 = vld [vmem:[%s619 + $0x90] sm:$0xff]
    %v639 = vld [vmem:[%s619 + $0x98] sm:$0xff]
    %v640 = vld [vmem:[%s619 + $0xa0] sm:$0xff]
    %v641 = vld [vmem:[%s619 + $0xa8] sm:$0xff]
    %v642 = vld [vmem:[%s619 + $0xb0] sm:$0xff]
    %v643 = vld [vmem:[%s619 + $0xb8] sm:$0xff]
    %v644 = vld [vmem:[%s619 + $0xc0] sm:$0xff]
    %v645 = vld [vmem:[%s619 + $0xc8] sm:$0xff]
    %v646 = vld [vmem:[%s619 + $0xd0] sm:$0xff]
    %v647 = vld [vmem:[%s619 + $0xd8] sm:$0xff]
    %v648 = vld [vmem:[%s619 + $0xe0] sm:$0xff]
    %v649 = vld [vmem:[%s619 + $0xe8] sm:$0xff]
    %v650 = vld [vmem:[%s619 + $0xf0] sm:$0xff]
    %v651 = vld [vmem:[%s619 + $0xf8] sm:$0xff]
    %v652 = vld [vmem:[%s619 + $0x100] sm:$0xff]
    %v653 = vld [vmem:[%s619 + $0x108] sm:$0xff]
    %v654 = vld [vmem:[%s619 + $0x110] sm:$0xff]
    %v655 = vld [vmem:[%s619 + $0x118] sm:$0xff]
    %v656 = vld [vmem:[%s619 + $0x120] sm:$0xff]
    %v657 = vld [vmem:[%s619 + $0x128] sm:$0xff]
    %v658 = vld [vmem:[%s619 + $0x130] sm:$0xff]
    %v659 = vld [vmem:[%s619 + $0x138] sm:$0xff]
    %v660 = vld [vmem:[%s619 + $0x140] sm:$0xff]
    %v661 = vld [vmem:[%s619 + $0x148] sm:$0xff]
    %v662 = vld [vmem:[%s619 + $0x150] sm:$0xff]
    %v663 = vld [vmem:[%s619 + $0x158] sm:$0xff]
    %v664 = vld [vmem:[%s619 + $0x160] sm:$0xff]
    %v665 = vld [vmem:[%s619 + $0x168] sm:$0xff]
    %v666 = vld [vmem:[%s619 + $0x170] sm:$0xff]
    %v667 = vld [vmem:[%s619 + $0x178] sm:$0xff]
    %668 = vmatprep.subr.mxu0 %v666
    %669 = vmatpush1.msra.mxu0 %v665
    %670 = vmatprep.subr.mxu0 %v663
    %671 = vmatpush1.msra.mxu0 %v662
    %672 = vmatprep.subr.mxu0 %v660
    %673 = vmatpush1.msra.mxu0 %v659
    %674 = vmatprep.subr.mxu0 %v657
    %675 = vmatpush1.msra.mxu0 %v656
    %676 = vmatprep.subr.mxu0 %v654
    %677 = vmatpush1.msra.mxu0 %v653
    %678 = vmatprep.subr.mxu0 %v651
    %679 = vmatpush1.msra.mxu0 %v650
    %680 = vmatprep.subr.mxu0 %v648
    %681 = vmatpush1.msra.mxu0 %v647
    %682 = vmatprep.subr.mxu0 %v645
    %683 = vmatpush1.msra.mxu0 %v644
    %684 = vmatprep.subr.mxu0 %v642
    %685 = vmatpush1.msra.mxu0 %v641
    %686 = vmatprep.subr.mxu0 %v639
    %687 = vmatpush1.msra.mxu0 %v638
    %688 = vmatprep.subr.mxu0 %v636
    %689 = vmatpush1.msra.mxu0 %v635
    %690 = vmatprep.subr.mxu0 %v633
    %691 = vmatpush1.msra.mxu0 %v632
    %692 = vmatprep.subr.mxu0 %v630
    %693 = vmatpush1.msra.mxu0 %v629
    %694 = vmatprep.subr.mxu0 %v627
    %695 = vmatpush1.msra.mxu0 %v626
    %696 = vmatprep.subr.mxu0 %v624
    %697 = vmatpush1.msra.mxu0 %v623
    %698 = vmatprep.subr.mxu0 %v621
    %699 = vmatpush1.msra.mxu0 %v620
    %700 = vmatprep.subr.mxu0 0.0
    %701 = vmatpush2.msra.mxu0 0.0
    %702 = vmatprep.subr.mxu0 0.0
    %703 = vmatpush2.msra.mxu0 0.0
    %704 = vmatprep.subr.mxu0 0.0
    %705 = vmatpush2.msra.mxu0 0.0
    %706 = vmatprep.subr.mxu0 0.0
    %707 = vmatpush2.msra.mxu0 0.0
    %708 = vmatprep.subr.mxu0 0.0
    %709 = vmatpush2.msra.mxu0 0.0
    %710 = vmatprep.subr.mxu0 0.0
    %711 = vmatpush2.msra.mxu0 0.0
    %712 = vmatprep.subr.mxu0 0.0
    %713 = vmatpush2.msra.mxu0 0.0
    %714 = vmatprep.subr.mxu0 0.0
    %715 = vmatpush2.msra.mxu0 0.0
    %716 = vmatprep.subr.mxu0 0.0
    %717 = vmatpush2.msra.mxu0 0.0
    %718 = vmatprep.subr.mxu0 0.0
    %719 = vmatpush2.msra.mxu0 0.0
    %720 = vmatprep.subr.mxu0 0.0
    %721 = vmatpush2.msra.mxu0 0.0
    %722 = vmatprep.subr.mxu0 0.0
    %723 = vmatpush2.msra.mxu0 0.0
    %724 = vmatprep.subr.mxu0 0.0
    %725 = vmatpush2.msra.mxu0 0.0
    %726 = vmatprep.subr.mxu0 0.0
    %727 = vmatpush2.msra.mxu0 0.0
    %728 = vmatprep.subr.mxu0 0.0
    %729 = vmatpush2.msra.mxu0 0.0
    %730 = vmatprep.subr.mxu0 0.0
    %731 = vmatpush2.msra.mxu0 0.0
    %732 = vmatprep.mubr.f32.mxu0 0.0
    %733 = vmatmul.mubr.f32.gmra.mxu0 %v611
    %v734 = vpop.f32.mrf.mxu0
    %v735 = vadd.f32 0.0, %v734
    %v736 = vpop.f32.mrf.mxu0
    %v737 = vadd.f32 0.0, %v736
    %738 = vmatprep.mubr.f32.mxu0 0.0
    %739 = vmatmul.mubr.f32.gmra.mxu0 %v612
    %v740 = vpop.f32.mrf.mxu0
    %v741 = vadd.f32 0.0, %v740
    %v742 = vpop.f32.mrf.mxu0
    %v743 = vadd.f32 0.0, %v742
    %744 = vmatprep.mubr.f32.mxu0 0.0
    %745 = vmatmul.mubr.f32.gmra.mxu0 %v613
    %v746 = vpop.f32.mrf.mxu0
    %v747 = vadd.f32 0.0, %v746
    %v748 = vpop.f32.mrf.mxu0
    %v749 = vadd.f32 0.0, %v748
    %750 = vmatprep.mubr.f32.mxu0 0.0
    %751 = vmatmul.mubr.f32.gmra.mxu0 %v614
    %v752 = vpop.f32.mrf.mxu0
    %v753 = vadd.f32 0.0, %v752
    %v754 = vpop.f32.mrf.mxu0
    %v755 = vadd.f32 0.0, %v754
    %756 = vmatprep.mubr.f32.mxu0 0.0
    %757 = vmatmul.mubr.f32.gmra.mxu0 %v615
    %v758 = vpop.f32.mrf.mxu0
    %v759 = vadd.f32 0.0, %v758
    %v760 = vpop.f32.mrf.mxu0
    %v761 = vadd.f32 0.0, %v760
    %762 = vmatprep.mubr.f32.mxu0 0.0
    %763 = vmatmul.mubr.f32.gmra.mxu0 %v616
    %v764 = vpop.f32.mrf.mxu0
    %v765 = vadd.f32 0.0, %v764
    %v766 = vpop.f32.mrf.mxu0
    %v767 = vadd.f32 0.0, %v766
    %768 = vmatprep.mubr.f32.mxu0 0.0
    %769 = vmatmul.mubr.f32.gmra.mxu0 %v617
    %v770 = vpop.f32.mrf.mxu0
    %v771 = vadd.f32 0.0, %v770
    %v772 = vpop.f32.mrf.mxu0
    %v773 = vadd.f32 0.0, %v772
    %774 = vmatprep.mubr.f32.mxu0 0.0
    %775 = vmatmul.mubr.f32.gmra.mxu0 %v618
    %v776 = vpop.f32.mrf.mxu0
    %v777 = vadd.f32 0.0, %v776
    %v778 = vpop.f32.mrf.mxu0
    %v779 = vadd.f32 0.0, %v778
    %780 = vdwg.mxu0
    %781 = vmatprep.subr.mxu0 0.0
    %782 = vmatpush1.msra.mxu0 %v667
    %783 = vmatprep.subr.mxu0 0.0
    %784 = vmatpush1.msra.mxu0 %v664
    %785 = vmatprep.subr.mxu0 0.0
    %786 = vmatpush1.msra.mxu0 %v661
    %787 = vmatprep.subr.mxu0 0.0
    %788 = vmatpush1.msra.mxu0 %v658
    %789 = vmatprep.subr.mxu0 0.0
    %790 = vmatpush1.msra.mxu0 %v655
    %791 = vmatprep.subr.mxu0 0.0
    %792 = vmatpush1.msra.mxu0 %v652
    %793 = vmatprep.subr.mxu0 0.0
    %794 = vmatpush1.msra.mxu0 %v649
    %795 = vmatprep.subr.mxu0 0.0
    %796 = vmatpush1.msra.mxu0 %v646
    %797 = vmatprep.subr.mxu0 0.0
    %798 = vmatpush1.msra.mxu0 %v643
    %799 = vmatprep.subr.mxu0 0.0
    %800 = vmatpush1.msra.mxu0 %v640
    %801 = vmatprep.subr.mxu0 0.0
    %802 = vmatpush1.msra.mxu0 %v637
    %803 = vmatprep.subr.mxu0 0.0
    %804 = vmatpush1.msra.mxu0 %v634
    %805 = vmatprep.subr.mxu0 0.0
    %806 = vmatpush1.msra.mxu0 %v631
    %807 = vmatprep.subr.mxu0 0.0
    %808 = vmatpush1.msra.mxu0 %v628
    %809 = vmatprep.subr.mxu0 0.0
    %810 = vmatpush1.msra.mxu0 %v625
    %811 = vmatprep.subr.mxu0 0.0
    %812 = vmatpush1.msra.mxu0 %v622
    %813 = vmatprep.subr.mxu0 0.0
    %814 = vmatpush2.msra.mxu0 0.0
    %815 = vmatprep.subr.mxu0 0.0
    %816 = vmatpush2.msra.mxu0 0.0
    %817 = vmatprep.subr.mxu0 0.0
    %818 = vmatpush2.msra.mxu0 0.0
    %819 = vmatprep.subr.mxu0 0.0
    %820 = vmatpush2.msra.mxu0 0.0
    %821 = vmatprep.subr.mxu0 0.0
    %822 = vmatpush2.msra.mxu0 0.0
    %823 = vmatprep.subr.mxu0 0.0
    %824 = vmatpush2.msra.mxu0 0.0
    %825 = vmatprep.subr.mxu0 0.0
    %826 = vmatpush2.msra.mxu0 0.0
    %827 = vmatprep.subr.mxu0 0.0
    %828 = vmatpush2.msra.mxu0 0.0
    %829 = vmatprep.subr.mxu0 0.0
    %830 = vmatpush2.msra.mxu0 0.0
    %831 = vmatprep.subr.mxu0 0.0
    %832 = vmatpush2.msra.mxu0 0.0
    %833 = vmatprep.subr.mxu0 0.0
    %834 = vmatpush2.msra.mxu0 0.0
    %835 = vmatprep.subr.mxu0 0.0
    %836 = vmatpush2.msra.mxu0 0.0
    %837 = vmatprep.subr.mxu0 0.0
    %838 = vmatpush2.msra.mxu0 0.0
    %839 = vmatprep.subr.mxu0 0.0
    %840 = vmatpush2.msra.mxu0 0.0
    %841 = vmatprep.subr.mxu0 0.0
    %842 = vmatpush2.msra.mxu0 0.0
    %843 = vmatprep.subr.mxu0 0.0
    %844 = vmatpush2.msra.mxu0 0.0
    %845 = vmatprep.mubr.f32.mxu0 0.0
    %846 = vmatmul.mubr.f32.gmra.mxu0 %v611
    %v847 = vpop.f32.mrf.mxu0
    %v848 = vadd.f32 0.0, %v847
    %v849 = vpop.f32.mrf.mxu0
    %850 = vmatprep.mubr.f32.mxu0 0.0
    %851 = vmatmul.mubr.f32.gmra.mxu0 %v612
    %v852 = vpop.f32.mrf.mxu0
    %v853 = vadd.f32 0.0, %v852
    %v854 = vpop.f32.mrf.mxu0
    %855 = vmatprep.mubr.f32.mxu0 0.0
    %856 = vmatmul.mubr.f32.gmra.mxu0 %v613
    %v857 = vpop.f32.mrf.mxu0
    %v858 = vadd.f32 0.0, %v857
    %v859 = vpop.f32.mrf.mxu0
    %860 = vmatprep.mubr.f32.mxu0 0.0
    %861 = vmatmul.mubr.f32.gmra.mxu0 %v614
    %v862 = vpop.f32.mrf.mxu0
    %v863 = vadd.f32 0.0, %v862
    %v864 = vpop.f32.mrf.mxu0
    %865 = vmatprep.mubr.f32.mxu0 0.0
    %866 = vmatmul.mubr.f32.gmra.mxu0 %v615
    %v867 = vpop.f32.mrf.mxu0
    %v868 = vadd.f32 0.0, %v867
    %v869 = vpop.f32.mrf.mxu0
    %870 = vmatprep.mubr.f32.mxu0 0.0
    %871 = vmatmul.mubr.f32.gmra.mxu0 %v616
    %v872 = vpop.f32.mrf.mxu0
    %v873 = vadd.f32 0.0, %v872
    %v874 = vpop.f32.mrf.mxu0
    %875 = vmatprep.mubr.f32.mxu0 0.0
    %876 = vmatmul.mubr.f32.gmra.mxu0 %v617
    %v877 = vpop.f32.mrf.mxu0
    %v878 = vadd.f32 0.0, %v877
    %v879 = vpop.f32.mrf.mxu0
    %880 = vmatprep.mubr.f32.mxu0 0.0
    %881 = vmatmul.mubr.f32.gmra.mxu0 %v618
    %v882 = vpop.f32.mrf.mxu0
    %v883 = vadd.f32 0.0, %v882
    %v884 = vpop.f32.mrf.mxu0
    %885 = vdwg.mxu0
    %v886 = vadd.f32 %v460, %v735
    %v887 = vadd.f32 %v462, %v737
    %v888 = vadd.f32 %v573, %v848
    %v889 = vadd.f32 %v466, %v741
    %v890 = vadd.f32 %v468, %v743
    %v891 = vadd.f32 %v578, %v853
    %v892 = vadd.f32 %v472, %v747
    %v893 = vadd.f32 %v474, %v749
    %v894 = vadd.f32 %v583, %v858
    %v895 = vadd.f32 %v478, %v753
    %v896 = vadd.f32 %v480, %v755
    %v897 = vadd.f32 %v588, %v863
    %v898 = vadd.f32 %v484, %v759
    %v899 = vadd.f32 %v486, %v761
    %v900 = vadd.f32 %v593, %v868
    %v901 = vadd.f32 %v490, %v765
    %v902 = vadd.f32 %v492, %v767
    %v903 = vadd.f32 %v598, %v873
    %v904 = vadd.f32 %v496, %v771
    %v905 = vadd.f32 %v498, %v773
    %v906 = vadd.f32 %v603, %v878
    %v907 = vadd.f32 %v502, %v777
    %v908 = vadd.f32 %v504, %v779
    %v909 = vadd.f32 %v608, %v883
    %v910 = vld [vmem:[#allocation2 + $0x3] sm:$0xff]
    %v911 = vld [vmem:[#allocation2 + $0x13] sm:$0xff]
    %v912 = vld [vmem:[#allocation2 + $0x23] sm:$0xff]
    %v913 = vld [vmem:[#allocation2 + $0x33] sm:$0xff]
    %v914 = vld [vmem:[#allocation2 + $0x43] sm:$0xff]
    %v915 = vld [vmem:[#allocation2 + $0x53] sm:$0xff]
    %v916 = vld [vmem:[#allocation2 + $0x63] sm:$0xff]
    %v917 = vld [vmem:[#allocation2 + $0x73] sm:$0xff]
    %s918 = scalar_lea.vmem [#allocation5], 1152
    %v919 = vld [vmem:[%s918] sm:$0xff]
    %v920 = vld [vmem:[%s918 + $0x8] sm:$0xff]
    %v921 = vld [vmem:[%s918 + $0x10] sm:$0xff]
    %v922 = vld [vmem:[%s918 + $0x18] sm:$0xff]
    %v923 = vld [vmem:[%s918 + $0x20] sm:$0xff]
    %v924 = vld [vmem:[%s918 + $0x28] sm:$0xff]
    %v925 = vld [vmem:[%s918 + $0x30] sm:$0xff]
    %v926 = vld [vmem:[%s918 + $0x38] sm:$0xff]
    %v927 = vld [vmem:[%s918 + $0x40] sm:$0xff]
    %v928 = vld [vmem:[%s918 + $0x48] sm:$0xff]
    %v929 = vld [vmem:[%s918 + $0x50] sm:$0xff]
    %v930 = vld [vmem:[%s918 + $0x58] sm:$0xff]
    %v931 = vld [vmem:[%s918 + $0x60] sm:$0xff]
    %v932 = vld [vmem:[%s918 + $0x68] sm:$0xff]
    %v933 = vld [vmem:[%s918 + $0x70] sm:$0xff]
    %v934 = vld [vmem:[%s918 + $0x78] sm:$0xff]
    %v935 = vld [vmem:[%s918 + $0x80] sm:$0xff]
    %v936 = vld [vmem:[%s918 + $0x88] sm:$0xff]
    %v937 = vld [vmem:[%s918 + $0x90] sm:$0xff]
    %v938 = vld [vmem:[%s918 + $0x98] sm:$0xff]
    %v939 = vld [vmem:[%s918 + $0xa0] sm:$0xff]
    %v940 = vld [vmem:[%s918 + $0xa8] sm:$0xff]
    %v941 = vld [vmem:[%s918 + $0xb0] sm:$0xff]
    %v942 = vld [vmem:[%s918 + $0xb8] sm:$0xff]
    %v943 = vld [vmem:[%s918 + $0xc0] sm:$0xff]
    %v944 = vld [vmem:[%s918 + $0xc8] sm:$0xff]
    %v945 = vld [vmem:[%s918 + $0xd0] sm:$0xff]
    %v946 = vld [vmem:[%s918 + $0xd8] sm:$0xff]
    %v947 = vld [vmem:[%s918 + $0xe0] sm:$0xff]
    %v948 = vld [vmem:[%s918 + $0xe8] sm:$0xff]
    %v949 = vld [vmem:[%s918 + $0xf0] sm:$0xff]
    %v950 = vld [vmem:[%s918 + $0xf8] sm:$0xff]
    %v951 = vld [vmem:[%s918 + $0x100] sm:$0xff]
    %v952 = vld [vmem:[%s918 + $0x108] sm:$0xff]
    %v953 = vld [vmem:[%s918 + $0x110] sm:$0xff]
    %v954 = vld [vmem:[%s918 + $0x118] sm:$0xff]
    %v955 = vld [vmem:[%s918 + $0x120] sm:$0xff]
    %v956 = vld [vmem:[%s918 + $0x128] sm:$0xff]
    %v957 = vld [vmem:[%s918 + $0x130] sm:$0xff]
    %v958 = vld [vmem:[%s918 + $0x138] sm:$0xff]
    %v959 = vld [vmem:[%s918 + $0x140] sm:$0xff]
    %v960 = vld [vmem:[%s918 + $0x148] sm:$0xff]
    %v961 = vld [vmem:[%s918 + $0x150] sm:$0xff]
    %v962 = vld [vmem:[%s918 + $0x158] sm:$0xff]
    %v963 = vld [vmem:[%s918 + $0x160] sm:$0xff]
    %v964 = vld [vmem:[%s918 + $0x168] sm:$0xff]
    %v965 = vld [vmem:[%s918 + $0x170] sm:$0xff]
    %v966 = vld [vmem:[%s918 + $0x178] sm:$0xff]
    %967 = vmatprep.subr.mxu0 %v965
    %968 = vmatpush1.msra.mxu0 %v964
    %969 = vmatprep.subr.mxu0 %v962
    %970 = vmatpush1.msra.mxu0 %v961
    %971 = vmatprep.subr.mxu0 %v959
    %972 = vmatpush1.msra.mxu0 %v958
    %973 = vmatprep.subr.mxu0 %v956
    %974 = vmatpush1.msra.mxu0 %v955
    %975 = vmatprep.subr.mxu0 %v953
    %976 = vmatpush1.msra.mxu0 %v952
    %977 = vmatprep.subr.mxu0 %v950
    %978 = vmatpush1.msra.mxu0 %v949
    %979 = vmatprep.subr.mxu0 %v947
    %980 = vmatpush1.msra.mxu0 %v946
    %981 = vmatprep.subr.mxu0 %v944
    %982 = vmatpush1.msra.mxu0 %v943
    %983 = vmatprep.subr.mxu0 %v941
    %984 = vmatpush1.msra.mxu0 %v940
    %985 = vmatprep.subr.mxu0 %v938
    %986 = vmatpush1.msra.mxu0 %v937
    %987 = vmatprep.subr.mxu0 %v935
    %988 = vmatpush1.msra.mxu0 %v934
    %989 = vmatprep.subr.mxu0 %v932
    %990 = vmatpush1.msra.mxu0 %v931
    %991 = vmatprep.subr.mxu0 %v929
    %992 = vmatpush1.msra.mxu0 %v928
    %993 = vmatprep.subr.mxu0 %v926
    %994 = vmatpush1.msra.mxu0 %v925
    %995 = vmatprep.subr.mxu0 %v923
    %996 = vmatpush1.msra.mxu0 %v922
    %997 = vmatprep.subr.mxu0 %v920
    %998 = vmatpush1.msra.mxu0 %v919
    %999 = vmatprep.subr.mxu0 0.0
    %1000 = vmatpush2.msra.mxu0 0.0
    %1001 = vmatprep.subr.mxu0 0.0
    %1002 = vmatpush2.msra.mxu0 0.0
    %1003 = vmatprep.subr.mxu0 0.0
    %1004 = vmatpush2.msra.mxu0 0.0
    %1005 = vmatprep.subr.mxu0 0.0
    %1006 = vmatpush2.msra.mxu0 0.0
    %1007 = vmatprep.subr.mxu0 0.0
    %1008 = vmatpush2.msra.mxu0 0.0
    %1009 = vmatprep.subr.mxu0 0.0
    %1010 = vmatpush2.msra.mxu0 0.0
    %1011 = vmatprep.subr.mxu0 0.0
    %1012 = vmatpush2.msra.mxu0 0.0
    %1013 = vmatprep.subr.mxu0 0.0
    %1014 = vmatpush2.msra.mxu0 0.0
    %1015 = vmatprep.subr.mxu0 0.0
    %1016 = vmatpush2.msra.mxu0 0.0
    %1017 = vmatprep.subr.mxu0 0.0
    %1018 = vmatpush2.msra.mxu0 0.0
    %1019 = vmatprep.subr.mxu0 0.0
    %1020 = vmatpush2.msra.mxu0 0.0
    %1021 = vmatprep.subr.mxu0 0.0
    %1022 = vmatpush2.msra.mxu0 0.0
    %1023 = vmatprep.subr.mxu0 0.0
    %1024 = vmatpush2.msra.mxu0 0.0
    %1025 = vmatprep.subr.mxu0 0.0
    %1026 = vmatpush2.msra.mxu0 0.0
    %1027 = vmatprep.subr.mxu0 0.0
    %1028 = vmatpush2.msra.mxu0 0.0
    %1029 = vmatprep.subr.mxu0 0.0
    %1030 = vmatpush2.msra.mxu0 0.0
    %1031 = vmatprep.mubr.f32.mxu0 0.0
    %1032 = vmatmul.mubr.f32.gmra.mxu0 %v910
    %v1033 = vpop.f32.mrf.mxu0
    %v1034 = vadd.f32 0.0, %v1033
    %v1035 = vpop.f32.mrf.mxu0
    %v1036 = vadd.f32 0.0, %v1035
    %1037 = vmatprep.mubr.f32.mxu0 0.0
    %1038 = vmatmul.mubr.f32.gmra.mxu0 %v911
    %v1039 = vpop.f32.mrf.mxu0
    %v1040 = vadd.f32 0.0, %v1039
    %v1041 = vpop.f32.mrf.mxu0
    %v1042 = vadd.f32 0.0, %v1041
    %1043 = vmatprep.mubr.f32.mxu0 0.0
    %1044 = vmatmul.mubr.f32.gmra.mxu0 %v912
    %v1045 = vpop.f32.mrf.mxu0
    %v1046 = vadd.f32 0.0, %v1045
    %v1047 = vpop.f32.mrf.mxu0
    %v1048 = vadd.f32 0.0, %v1047
    %1049 = vmatprep.mubr.f32.mxu0 0.0
    %1050 = vmatmul.mubr.f32.gmra.mxu0 %v913
    %v1051 = vpop.f32.mrf.mxu0
    %v1052 = vadd.f32 0.0, %v1051
    %v1053 = vpop.f32.mrf.mxu0
    %v1054 = vadd.f32 0.0, %v1053
    %1055 = vmatprep.mubr.f32.mxu0 0.0
    %1056 = vmatmul.mubr.f32.gmra.mxu0 %v914
    %v1057 = vpop.f32.mrf.mxu0
    %v1058 = vadd.f32 0.0, %v1057
    %v1059 = vpop.f32.mrf.mxu0
    %v1060 = vadd.f32 0.0, %v1059
    %1061 = vmatprep.mubr.f32.mxu0 0.0
    %1062 = vmatmul.mubr.f32.gmra.mxu0 %v915
    %v1063 = vpop.f32.mrf.mxu0
    %v1064 = vadd.f32 0.0, %v1063
    %v1065 = vpop.f32.mrf.mxu0
    %v1066 = vadd.f32 0.0, %v1065
    %1067 = vmatprep.mubr.f32.mxu0 0.0
    %1068 = vmatmul.mubr.f32.gmra.mxu0 %v916
    %v1069 = vpop.f32.mrf.mxu0
    %v1070 = vadd.f32 0.0, %v1069
    %v1071 = vpop.f32.mrf.mxu0
    %v1072 = vadd.f32 0.0, %v1071
    %1073 = vmatprep.mubr.f32.mxu0 0.0
    %1074 = vmatmul.mubr.f32.gmra.mxu0 %v917
    %v1075 = vpop.f32.mrf.mxu0
    %v1076 = vadd.f32 0.0, %v1075
    %v1077 = vpop.f32.mrf.mxu0
    %v1078 = vadd.f32 0.0, %v1077
    %1079 = vdwg.mxu0
    %1080 = vmatprep.subr.mxu0 0.0
    %1081 = vmatpush1.msra.mxu0 %v966
    %1082 = vmatprep.subr.mxu0 0.0
    %1083 = vmatpush1.msra.mxu0 %v963
    %1084 = vmatprep.subr.mxu0 0.0
    %1085 = vmatpush1.msra.mxu0 %v960
    %1086 = vmatprep.subr.mxu0 0.0
    %1087 = vmatpush1.msra.mxu0 %v957
    %1088 = vmatprep.subr.mxu0 0.0
    %1089 = vmatpush1.msra.mxu0 %v954
    %1090 = vmatprep.subr.mxu0 0.0
    %1091 = vmatpush1.msra.mxu0 %v951
    %1092 = vmatprep.subr.mxu0 0.0
    %1093 = vmatpush1.msra.mxu0 %v948
    %1094 = vmatprep.subr.mxu0 0.0
    %1095 = vmatpush1.msra.mxu0 %v945
    %1096 = vmatprep.subr.mxu0 0.0
    %1097 = vmatpush1.msra.mxu0 %v942
    %1098 = vmatprep.subr.mxu0 0.0
    %1099 = vmatpush1.msra.mxu0 %v939
    %1100 = vmatprep.subr.mxu0 0.0
    %1101 = vmatpush1.msra.mxu0 %v936
    %1102 = vmatprep.subr.mxu0 0.0
    %1103 = vmatpush1.msra.mxu0 %v933
    %1104 = vmatprep.subr.mxu0 0.0
    %1105 = vmatpush1.msra.mxu0 %v930
    %1106 = vmatprep.subr.mxu0 0.0
    %1107 = vmatpush1.msra.mxu0 %v927
    %1108 = vmatprep.subr.mxu0 0.0
    %1109 = vmatpush1.msra.mxu0 %v924
    %1110 = vmatprep.subr.mxu0 0.0
    %1111 = vmatpush1.msra.mxu0 %v921
    %1112 = vmatprep.subr.mxu0 0.0
    %1113 = vmatpush2.msra.mxu0 0.0
    %1114 = vmatprep.subr.mxu0 0.0
    %1115 = vmatpush2.msra.mxu0 0.0
    %1116 = vmatprep.subr.mxu0 0.0
    %1117 = vmatpush2.msra.mxu0 0.0
    %1118 = vmatprep.subr.mxu0 0.0
    %1119 = vmatpush2.msra.mxu0 0.0
    %1120 = vmatprep.subr.mxu0 0.0
    %1121 = vmatpush2.msra.mxu0 0.0
    %1122 = vmatprep.subr.mxu0 0.0
    %1123 = vmatpush2.msra.mxu0 0.0
    %1124 = vmatprep.subr.mxu0 0.0
    %1125 = vmatpush2.msra.mxu0 0.0
    %1126 = vmatprep.subr.mxu0 0.0
    %1127 = vmatpush2.msra.mxu0 0.0
    %1128 = vmatprep.subr.mxu0 0.0
    %1129 = vmatpush2.msra.mxu0 0.0
    %1130 = vmatprep.subr.mxu0 0.0
    %1131 = vmatpush2.msra.mxu0 0.0
    %1132 = vmatprep.subr.mxu0 0.0
    %1133 = vmatpush2.msra.mxu0 0.0
    %1134 = vmatprep.subr.mxu0 0.0
    %1135 = vmatpush2.msra.mxu0 0.0
    %1136 = vmatprep.subr.mxu0 0.0
    %1137 = vmatpush2.msra.mxu0 0.0
    %1138 = vmatprep.subr.mxu0 0.0
    %1139 = vmatpush2.msra.mxu0 0.0
    %1140 = vmatprep.subr.mxu0 0.0
    %1141 = vmatpush2.msra.mxu0 0.0
    %1142 = vmatprep.subr.mxu0 0.0
    %1143 = vmatpush2.msra.mxu0 0.0
    %1144 = vmatprep.mubr.f32.mxu0 0.0
    %1145 = vmatmul.mubr.f32.gmra.mxu0 %v910
    %v1146 = vpop.f32.mrf.mxu0
    %v1147 = vadd.f32 0.0, %v1146
    %v1148 = vpop.f32.mrf.mxu0
    %1149 = vmatprep.mubr.f32.mxu0 0.0
    %1150 = vmatmul.mubr.f32.gmra.mxu0 %v911
    %v1151 = vpop.f32.mrf.mxu0
    %v1152 = vadd.f32 0.0, %v1151
    %v1153 = vpop.f32.mrf.mxu0
    %1154 = vmatprep.mubr.f32.mxu0 0.0
    %1155 = vmatmul.mubr.f32.gmra.mxu0 %v912
    %v1156 = vpop.f32.mrf.mxu0
    %v1157 = vadd.f32 0.0, %v1156
    %v1158 = vpop.f32.mrf.mxu0
    %1159 = vmatprep.mubr.f32.mxu0 0.0
    %1160 = vmatmul.mubr.f32.gmra.mxu0 %v913
    %v1161 = vpop.f32.mrf.mxu0
    %v1162 = vadd.f32 0.0, %v1161
    %v1163 = vpop.f32.mrf.mxu0
    %1164 = vmatprep.mubr.f32.mxu0 0.0
    %1165 = vmatmul.mubr.f32.gmra.mxu0 %v914
    %v1166 = vpop.f32.mrf.mxu0
    %v1167 = vadd.f32 0.0, %v1166
    %v1168 = vpop.f32.mrf.mxu0
    %1169 = vmatprep.mubr.f32.mxu0 0.0
    %1170 = vmatmul.mubr.f32.gmra.mxu0 %v915
    %v1171 = vpop.f32.mrf.mxu0
    %v1172 = vadd.f32 0.0, %v1171
    %v1173 = vpop.f32.mrf.mxu0
    %1174 = vmatprep.mubr.f32.mxu0 0.0
    %1175 = vmatmul.mubr.f32.gmra.mxu0 %v916
    %v1176 = vpop.f32.mrf.mxu0
    %v1177 = vadd.f32 0.0, %v1176
    %v1178 = vpop.f32.mrf.mxu0
    %1179 = vmatprep.mubr.f32.mxu0 0.0
    %1180 = vmatmul.mubr.f32.gmra.mxu0 %v917
    %v1181 = vpop.f32.mrf.mxu0
    %v1182 = vadd.f32 0.0, %v1181
    %v1183 = vpop.f32.mrf.mxu0
    %1184 = vdwg.mxu0
    %v1185 = vadd.f32 %v886, %v1034
    %v1186 = vadd.f32 %v887, %v1036
    %v1187 = vadd.f32 %v888, %v1147
    %v1188 = vadd.f32 %v889, %v1040
    %v1189 = vadd.f32 %v890, %v1042
    %v1190 = vadd.f32 %v891, %v1152
    %v1191 = vadd.f32 %v892, %v1046
    %v1192 = vadd.f32 %v893, %v1048
    %v1193 = vadd.f32 %v894, %v1157
    %v1194 = vadd.f32 %v895, %v1052
    %v1195 = vadd.f32 %v896, %v1054
    %v1196 = vadd.f32 %v897, %v1162
    %v1197 = vadd.f32 %v898, %v1058
    %v1198 = vadd.f32 %v899, %v1060
    %v1199 = vadd.f32 %v900, %v1167
    %v1200 = vadd.f32 %v901, %v1064
    %v1201 = vadd.f32 %v902, %v1066
    %v1202 = vadd.f32 %v903, %v1172
    %v1203 = vadd.f32 %v904, %v1070
    %v1204 = vadd.f32 %v905, %v1072
    %v1205 = vadd.f32 %v906, %v1177
    %v1206 = vadd.f32 %v907, %v1076
    %v1207 = vadd.f32 %v908, %v1078
    %v1208 = vadd.f32 %v909, %v1182
    %v1209 = vld [vmem:[%s2] sm:$0x7]
    %v1211 = vlaneseq
    %v1212 = vshrl.u32 %v1211, 7
    %v1213 = vsub.s32 0, %v1212
    %v1214 = vrot.slane %v1209, %v1213
    %v1215 = vlaneseq
    %v1216 = vshrl.u32 %v1215, 7
    %v1217 = vsub.s32 1, %v1216
    %v1218 = vrot.slane %v1209, %v1217
    %v1219 = vlaneseq
    %v1220 = vshrl.u32 %v1219, 7
    %v1221 = vsub.s32 2, %v1220
    %v1222 = vrot.slane %v1209, %v1221
    %v1226 = vadd.f32 %v1185, %v1214
    %v1227 = vadd.f32 %v1186, %v1218
    %v1228 = vadd.f32 %v1187, %v1222
    %v1229 = vadd.f32 %v1188, %v1214
    %v1230 = vadd.f32 %v1189, %v1218
    %v1231 = vadd.f32 %v1190, %v1222
    %v1232 = vadd.f32 %v1191, %v1214
    %v1233 = vadd.f32 %v1192, %v1218
    %v1234 = vadd.f32 %v1193, %v1222
    %v1235 = vadd.f32 %v1194, %v1214
    %v1236 = vadd.f32 %v1195, %v1218
    %v1237 = vadd.f32 %v1196, %v1222
    %v1238 = vadd.f32 %v1197, %v1214
    %v1239 = vadd.f32 %v1198, %v1218
    %v1240 = vadd.f32 %v1199, %v1222
    %v1241 = vadd.f32 %v1200, %v1214
    %v1242 = vadd.f32 %v1201, %v1218
    %v1243 = vadd.f32 %v1202, %v1222
    %v1244 = vadd.f32 %v1203, %v1214
    %v1245 = vadd.f32 %v1204, %v1218
    %v1246 = vadd.f32 %v1205, %v1222
    %v1247 = vadd.f32 %v1206, %v1214
    %v1248 = vadd.f32 %v1207, %v1218
    %v1249 = vadd.f32 %v1208, %v1222
    %v1250 = vmax.f32 %v1226, 0.0
    %v1251 = vmax.f32 %v1227, 0.0
    %v1252 = vmax.f32 %v1228, 0.0
    %v1253 = vmax.f32 %v1229, 0.0
    %v1254 = vmax.f32 %v1230, 0.0
    %v1255 = vmax.f32 %v1231, 0.0
    %v1256 = vmax.f32 %v1232, 0.0
    %v1257 = vmax.f32 %v1233, 0.0
    %v1258 = vmax.f32 %v1234, 0.0
    %v1259 = vmax.f32 %v1235, 0.0
    %v1260 = vmax.f32 %v1236, 0.0
    %v1261 = vmax.f32 %v1237, 0.0
    %v1262 = vmax.f32 %v1238, 0.0
    %v1263 = vmax.f32 %v1239, 0.0
    %v1264 = vmax.f32 %v1240, 0.0
    %v1265 = vmax.f32 %v1241, 0.0
    %v1266 = vmax.f32 %v1242, 0.0
    %v1267 = vmax.f32 %v1243, 0.0
    %v1268 = vmax.f32 %v1244, 0.0
    %v1269 = vmax.f32 %v1245, 0.0
    %v1270 = vmax.f32 %v1246, 0.0
    %v1271 = vmax.f32 %v1247, 0.0
    %v1272 = vmax.f32 %v1248, 0.0
    %v1273 = vmax.f32 %v1249, 0.0
    %v1274 = vlaneseq
    %v1275 = vshrl.u32 %v1274, 7
    %v1276 = vlaneseq
    %v1277 = vand.u32 %v1276, 127
    %v1278 = vadd.s32 %v1277, 128
    %v1279 = vadd.s32 %v1277, 256
    %vm1280 = vcmp.ge.s32.totalorder %v1277, 0
    %vm1281 = vcmp.ge.s32.totalorder %v1278, 0
    %vm1282 = vcmp.ge.s32.totalorder %v1279, 0
    %vm1283 = vcmp.lt.s32.totalorder %v1277, 128
    %vm1284 = vcmp.lt.s32.totalorder %v1278, 128
    %vm1285 = vcmp.lt.s32.totalorder %v1279, 128
    %vm1286 = vmand %vm1280, %vm1283
    %vm1287 = vmand %vm1281, %vm1284
    %vm1288 = vmand %vm1282, %vm1285
    %vm1289 = vcmp.lt.s32.totalorder %v1275, 7
    %vm1290 = vmand %vm1286, %vm1289
    %vm1291 = vmand %vm1287, %vm1289
    %vm1292 = vmand %vm1288, %vm1289
    %vm1293 = vcmp.ge.s32.totalorder %v1277, 128
    %vm1294 = vcmp.ge.s32.totalorder %v1278, 128
    %vm1295 = vcmp.ge.s32.totalorder %v1279, 128
    %vm1296 = vcmp.lt.s32.totalorder %v1277, 256
    %vm1297 = vcmp.lt.s32.totalorder %v1278, 256
    %vm1298 = vcmp.lt.s32.totalorder %v1279, 256
    %vm1299 = vmand %vm1293, %vm1296
    %vm1300 = vmand %vm1294, %vm1297
    %vm1301 = vmand %vm1295, %vm1298
    %vm1302 = vcmp.lt.s32.totalorder %v1275, 6
    %vm1303 = vmand %vm1299, %vm1302
    %vm1304 = vmand %vm1300, %vm1302
    %vm1305 = vmand %vm1301, %vm1302
    %vm1306 = vmor %vm1290, %vm1303
    %vm1307 = vmor %vm1291, %vm1304
    %vm1308 = vmor %vm1292, %vm1305
    %vm1309 = vcmp.ge.s32.totalorder %v1277, 256
    %vm1310 = vcmp.ge.s32.totalorder %v1278, 256
    %vm1311 = vcmp.ge.s32.totalorder %v1279, 256
    %vm1312 = vcmp.lt.s32.totalorder %v1277, 384
    %vm1313 = vcmp.lt.s32.totalorder %v1278, 384
    %vm1314 = vcmp.lt.s32.totalorder %v1279, 384
    %vm1315 = vmand %vm1309, %vm1312
    %vm1316 = vmand %vm1310, %vm1313
    %vm1317 = vmand %vm1311, %vm1314
    %vm1318 = vcmp.lt.s32.totalorder %v1275, 5
    %vm1319 = vmand %vm1315, %vm1318
    %vm1320 = vmand %vm1316, %vm1318
    %vm1321 = vmand %vm1317, %vm1318
    %vm1322 = vmor %vm1306, %vm1319
    %vm1323 = vmor %vm1307, %vm1320
    %vm1324 = vmor %vm1308, %vm1321
    %v1325 = vsel %vm1322, 1, 0
    %v1326 = vsel %vm1323, 1, 0
    %v1327 = vsel %vm1324, 1, 0
    %vm1328 = vcmp.eq.s32.totalorder %v1325, 1
    %vm1329 = vcmp.eq.s32.totalorder %v1326, 1
    %vm1330 = vcmp.eq.s32.totalorder %v1327, 1
    %v1331 = vsel %vm1328, %v1250, 0.0
    %v1332 = vsel %vm1329, %v1251, 0.0
    %v1333 = vsel %vm1330, %v1252, 0.0
    %v1334 = vsel %vm1328, %v1253, 0.0
    %v1335 = vsel %vm1329, %v1254, 0.0
    %v1336 = vsel %vm1330, %v1255, 0.0
    %v1337 = vsel %vm1328, %v1256, 0.0
    %v1338 = vsel %vm1329, %v1257, 0.0
    %v1339 = vsel %vm1330, %v1258, 0.0
    %v1340 = vsel %vm1328, %v1259, 0.0
    %v1341 = vsel %vm1329, %v1260, 0.0
    %v1342 = vsel %vm1330, %v1261, 0.0
    %v1343 = vsel %vm1328, %v1262, 0.0
    %v1344 = vsel %vm1329, %v1263, 0.0
    %v1345 = vsel %vm1330, %v1264, 0.0
    %v1346 = vsel %vm1328, %v1265, 0.0
    %v1347 = vsel %vm1329, %v1266, 0.0
    %v1348 = vsel %vm1330, %v1267, 0.0
    %v1349 = vsel %vm1328, %v1268, 0.0
    %v1350 = vsel %vm1329, %v1269, 0.0
    %v1351 = vsel %vm1330, %v1270, 0.0
    %v1352 = vsel %vm1328, %v1271, 0.0
    %v1353 = vsel %vm1329, %v1272, 0.0
    %v1354 = vsel %vm1330, %v1273, 0.0
    %v1355 = vrot.slane %v1331, 4
    %v1356 = vmax.f32 %v1331, %v1355
    %v1357 = vrot.slane %v1356, 2
    %v1358 = vmax.f32 %v1356, %v1357
    %v1359 = vrot.slane %v1358, 1
    %v1360 = vmax.f32 %v1358, %v1359
    %v1361 = vrot.slane %v1332, 4
    %v1362 = vmax.f32 %v1332, %v1361
    %v1363 = vrot.slane %v1362, 2
    %v1364 = vmax.f32 %v1362, %v1363
    %v1365 = vrot.slane %v1364, 1
    %v1366 = vmax.f32 %v1364, %v1365
    %v1367 = vrot.slane %v1333, 4
    %v1368 = vmax.f32 %v1333, %v1367
    %v1369 = vrot.slane %v1368, 2
    %v1370 = vmax.f32 %v1368, %v1369
    %v1371 = vrot.slane %v1370, 1
    %v1372 = vmax.f32 %v1370, %v1371
    %v1373 = vrot.slane %v1334, 4
    %v1374 = vmax.f32 %v1334, %v1373
    %v1375 = vrot.slane %v1374, 2
    %v1376 = vmax.f32 %v1374, %v1375
    %v1377 = vrot.slane %v1376, 1
    %v1378 = vmax.f32 %v1376, %v1377
    %v1379 = vrot.slane %v1335, 4
    %v1380 = vmax.f32 %v1335, %v1379
    %v1381 = vrot.slane %v1380, 2
    %v1382 = vmax.f32 %v1380, %v1381
    %v1383 = vrot.slane %v1382, 1
    %v1384 = vmax.f32 %v1382, %v1383
    %v1385 = vrot.slane %v1336, 4
    %v1386 = vmax.f32 %v1336, %v1385
    %v1387 = vrot.slane %v1386, 2
    %v1388 = vmax.f32 %v1386, %v1387
    %v1389 = vrot.slane %v1388, 1
    %v1390 = vmax.f32 %v1388, %v1389
    %v1391 = vrot.slane %v1337, 4
    %v1392 = vmax.f32 %v1337, %v1391
    %v1393 = vrot.slane %v1392, 2
    %v1394 = vmax.f32 %v1392, %v1393
    %v1395 = vrot.slane %v1394, 1
    %v1396 = vmax.f32 %v1394, %v1395
    %v1397 = vrot.slane %v1338, 4
    %v1398 = vmax.f32 %v1338, %v1397
    %v1399 = vrot.slane %v1398, 2
    %v1400 = vmax.f32 %v1398, %v1399
    %v1401 = vrot.slane %v1400, 1
    %v1402 = vmax.f32 %v1400, %v1401
    %v1403 = vrot.slane %v1339, 4
    %v1404 = vmax.f32 %v1339, %v1403
    %v1405 = vrot.slane %v1404, 2
    %v1406 = vmax.f32 %v1404, %v1405
    %v1407 = vrot.slane %v1406, 1
    %v1408 = vmax.f32 %v1406, %v1407
    %v1409 = vrot.slane %v1340, 4
    %v1410 = vmax.f32 %v1340, %v1409
    %v1411 = vrot.slane %v1410, 2
    %v1412 = vmax.f32 %v1410, %v1411
    %v1413 = vrot.slane %v1412, 1
    %v1414 = vmax.f32 %v1412, %v1413
    %v1415 = vrot.slane %v1341, 4
    %v1416 = vmax.f32 %v1341, %v1415
    %v1417 = vrot.slane %v1416, 2
    %v1418 = vmax.f32 %v1416, %v1417
    %v1419 = vrot.slane %v1418, 1
    %v1420 = vmax.f32 %v1418, %v1419
    %v1421 = vrot.slane %v1342, 4
    %v1422 = vmax.f32 %v1342, %v1421
    %v1423 = vrot.slane %v1422, 2
    %v1424 = vmax.f32 %v1422, %v1423
    %v1425 = vrot.slane %v1424, 1
    %v1426 = vmax.f32 %v1424, %v1425
    %v1427 = vrot.slane %v1343, 4
    %v1428 = vmax.f32 %v1343, %v1427
    %v1429 = vrot.slane %v1428, 2
    %v1430 = vmax.f32 %v1428, %v1429
    %v1431 = vrot.slane %v1430, 1
    %v1432 = vmax.f32 %v1430, %v1431
    %v1433 = vrot.slane %v1344, 4
    %v1434 = vmax.f32 %v1344, %v1433
    %v1435 = vrot.slane %v1434, 2
    %v1436 = vmax.f32 %v1434, %v1435
    %v1437 = vrot.slane %v1436, 1
    %v1438 = vmax.f32 %v1436, %v1437
    %v1439 = vrot.slane %v1345, 4
    %v1440 = vmax.f32 %v1345, %v1439
    %v1441 = vrot.slane %v1440, 2
    %v1442 = vmax.f32 %v1440, %v1441
    %v1443 = vrot.slane %v1442, 1
    %v1444 = vmax.f32 %v1442, %v1443
    %v1445 = vrot.slane %v1346, 4
    %v1446 = vmax.f32 %v1346, %v1445
    %v1447 = vrot.slane %v1446, 2
    %v1448 = vmax.f32 %v1446, %v1447
    %v1449 = vrot.slane %v1448, 1
    %v1450 = vmax.f32 %v1448, %v1449
    %v1451 = vrot.slane %v1347, 4
    %v1452 = vmax.f32 %v1347, %v1451
    %v1453 = vrot.slane %v1452, 2
    %v1454 = vmax.f32 %v1452, %v1453
    %v1455 = vrot.slane %v1454, 1
    %v1456 = vmax.f32 %v1454, %v1455
    %v1457 = vrot.slane %v1348, 4
    %v1458 = vmax.f32 %v1348, %v1457
    %v1459 = vrot.slane %v1458, 2
    %v1460 = vmax.f32 %v1458, %v1459
    %v1461 = vrot.slane %v1460, 1
    %v1462 = vmax.f32 %v1460, %v1461
    %v1463 = vrot.slane %v1349, 4
    %v1464 = vmax.f32 %v1349, %v1463
    %v1465 = vrot.slane %v1464, 2
    %v1466 = vmax.f32 %v1464, %v1465
    %v1467 = vrot.slane %v1466, 1
    %v1468 = vmax.f32 %v1466, %v1467
    %v1469 = vrot.slane %v1350, 4
    %v1470 = vmax.f32 %v1350, %v1469
    %v1471 = vrot.slane %v1470, 2
    %v1472 = vmax.f32 %v1470, %v1471
    %v1473 = vrot.slane %v1472, 1
    %v1474 = vmax.f32 %v1472, %v1473
    %v1475 = vrot.slane %v1351, 4
    %v1476 = vmax.f32 %v1351, %v1475
    %v1477 = vrot.slane %v1476, 2
    %v1478 = vmax.f32 %v1476, %v1477
    %v1479 = vrot.slane %v1478, 1
    %v1480 = vmax.f32 %v1478, %v1479
    %v1481 = vrot.slane %v1352, 4
    %v1482 = vmax.f32 %v1352, %v1481
    %v1483 = vrot.slane %v1482, 2
    %v1484 = vmax.f32 %v1482, %v1483
    %v1485 = vrot.slane %v1484, 1
    %v1486 = vmax.f32 %v1484, %v1485
    %v1487 = vrot.slane %v1353, 4
    %v1488 = vmax.f32 %v1353, %v1487
    %v1489 = vrot.slane %v1488, 2
    %v1490 = vmax.f32 %v1488, %v1489
    %v1491 = vrot.slane %v1490, 1
    %v1492 = vmax.f32 %v1490, %v1491
    %v1493 = vrot.slane %v1354, 4
    %v1494 = vmax.f32 %v1354, %v1493
    %v1495 = vrot.slane %v1494, 2
    %v1496 = vmax.f32 %v1494, %v1495
    %v1497 = vrot.slane %v1496, 1
    %v1498 = vmax.f32 %v1496, %v1497
    %v1499 = vld [vmem:[#allocation7] sm:$0xff]
    %v1500 = vld [vmem:[#allocation7 + $0x8] sm:$0xff]
    %v1501 = vld [vmem:[#allocation7 + $0x10] sm:$0xff]
    %v1502 = vld [vmem:[#allocation7 + $0x18] sm:$0xff]
    %v1503 = vld [vmem:[#allocation7 + $0x20] sm:$0xff]
    %v1504 = vld [vmem:[#allocation7 + $0x28] sm:$0xff]
    %v1505 = vld [vmem:[#allocation7 + $0x30] sm:$0xff]
    %v1506 = vld [vmem:[#allocation7 + $0x38] sm:$0xff]
    %v1507 = vld [vmem:[#allocation7 + $0x40] sm:$0xff]
    %v1508 = vld [vmem:[#allocation7 + $0x48] sm:$0xff]
    %v1509 = vld [vmem:[#allocation7 + $0x50] sm:$0xff]
    %v1510 = vld [vmem:[#allocation7 + $0x58] sm:$0xff]
    %v1511 = vld [vmem:[#allocation7 + $0x60] sm:$0xff]
    %v1512 = vld [vmem:[#allocation7 + $0x68] sm:$0xff]
    %v1513 = vld [vmem:[#allocation7 + $0x70] sm:$0xff]
    %v1514 = vld [vmem:[#allocation7 + $0x78] sm:$0xff]
    %v1515 = vld [vmem:[#allocation7 + $0x80] sm:$0xff]
    %v1516 = vld [vmem:[#allocation7 + $0x88] sm:$0xff]
    %v1517 = vld [vmem:[#allocation7 + $0x90] sm:$0xff]
    %v1518 = vld [vmem:[#allocation7 + $0x98] sm:$0xff]
    %v1519 = vld [vmem:[#allocation7 + $0xa0] sm:$0xff]
    %v1520 = vld [vmem:[#allocation7 + $0xa8] sm:$0xff]
    %v1521 = vld [vmem:[#allocation7 + $0xb0] sm:$0xff]
    %v1522 = vld [vmem:[#allocation7 + $0xb8] sm:$0xff]
    %v1523 = vld [vmem:[#allocation7 + $0xc0] sm:$0xff]
    %v1524 = vld [vmem:[#allocation7 + $0xc8] sm:$0xff]
    %v1525 = vld [vmem:[#allocation7 + $0xd0] sm:$0xff]
    %v1526 = vld [vmem:[#allocation7 + $0xd8] sm:$0xff]
    %v1527 = vld [vmem:[#allocation7 + $0xe0] sm:$0xff]
    %v1528 = vld [vmem:[#allocation7 + $0xe8] sm:$0xff]
    %v1529 = vld [vmem:[#allocation7 + $0xf0] sm:$0xff]
    %v1530 = vld [vmem:[#allocation7 + $0xf8] sm:$0xff]
    %v1531 = vld [vmem:[#allocation7 + $0x100] sm:$0xff]
    %v1532 = vld [vmem:[#allocation7 + $0x108] sm:$0xff]
    %v1533 = vld [vmem:[#allocation7 + $0x110] sm:$0xff]
    %v1534 = vld [vmem:[#allocation7 + $0x118] sm:$0xff]
    %v1535 = vld [vmem:[#allocation7 + $0x120] sm:$0xff]
    %v1536 = vld [vmem:[#allocation7 + $0x128] sm:$0xff]
    %v1537 = vld [vmem:[#allocation7 + $0x130] sm:$0xff]
    %v1538 = vld [vmem:[#allocation7 + $0x138] sm:$0xff]
    %v1539 = vld [vmem:[#allocation7 + $0x140] sm:$0xff]
    %v1540 = vld [vmem:[#allocation7 + $0x148] sm:$0xff]
    %v1541 = vld [vmem:[#allocation7 + $0x150] sm:$0xff]
    %v1542 = vld [vmem:[#allocation7 + $0x158] sm:$0xff]
    %v1543 = vld [vmem:[#allocation7 + $0x160] sm:$0xff]
    %v1544 = vld [vmem:[#allocation7 + $0x168] sm:$0xff]
    %v1545 = vld [vmem:[#allocation7 + $0x170] sm:$0xff]
    %v1546 = vld [vmem:[#allocation7 + $0x178] sm:$0xff]
    %v1547 = vld [vmem:[%s4] sm:$0x1]
    %v1549 = vlaneseq
    %v1550 = vshrl.u32 %v1549, 7
    %v1551 = vsub.s32 0, %v1550
    %v1552 = vrot.slane %v1547, %v1551
    %vm1578 = vcmask 1041409
    %v1579 = vsel %vm1578, %v1378, %v1360
    %vm1580 = vcmask 1042434
    %v1581 = vsel %vm1580, %v1396, %v1579
    %vm1582 = vcmask 1043459
    %v1583 = vsel %vm1582, %v1414, %v1581
    %vm1584 = vcmask 1044484
    %v1585 = vsel %vm1584, %v1432, %v1583
    %vm1586 = vcmask 1045509
    %v1587 = vsel %vm1586, %v1450, %v1585
    %vm1588 = vcmask 1046534
    %v1589 = vsel %vm1588, %v1468, %v1587
    %vm1590 = vcmask 1047559
    %v1591 = vsel %vm1590, %v1486, %v1589
    %v1592 = vsel %vm1578, %v1384, %v1366
    %v1593 = vsel %vm1580, %v1402, %v1592
    %v1594 = vsel %vm1582, %v1420, %v1593
    %v1595 = vsel %vm1584, %v1438, %v1594
    %v1596 = vsel %vm1586, %v1456, %v1595
    %v1597 = vsel %vm1588, %v1474, %v1596
    %v1598 = vsel %vm1590, %v1492, %v1597
    %v1599 = vsel %vm1578, %v1390, %v1372
    %v1600 = vsel %vm1580, %v1408, %v1599
    %v1601 = vsel %vm1582, %v1426, %v1600
    %v1602 = vsel %vm1584, %v1444, %v1601
    %v1603 = vsel %vm1586, %v1462, %v1602
    %v1604 = vsel %vm1588, %v1480, %v1603
    %v1605 = vsel %vm1590, %v1498, %v1604
    %1609 = vmatprep.subr.mxu0 0.0
    %1610 = vmatpush1.msra.mxu0 %v1514
    %1611 = vmatprep.subr.mxu0 0.0
    %1612 = vmatpush1.msra.mxu0 %v1513
    %1613 = vmatprep.subr.mxu0 0.0
    %1614 = vmatpush1.msra.mxu0 %v1512
    %1615 = vmatprep.subr.mxu0 0.0
    %1616 = vmatpush1.msra.mxu0 %v1511
    %1617 = vmatprep.subr.mxu0 0.0
    %1618 = vmatpush1.msra.mxu0 %v1510
    %1619 = vmatprep.subr.mxu0 0.0
    %1620 = vmatpush1.msra.mxu0 %v1509
    %1621 = vmatprep.subr.mxu0 0.0
    %1622 = vmatpush1.msra.mxu0 %v1508
    %1623 = vmatprep.subr.mxu0 0.0
    %1624 = vmatpush1.msra.mxu0 %v1507
    %1625 = vmatprep.subr.mxu0 0.0
    %1626 = vmatpush1.msra.mxu0 %v1506
    %1627 = vmatprep.subr.mxu0 0.0
    %1628 = vmatpush1.msra.mxu0 %v1505
    %1629 = vmatprep.subr.mxu0 0.0
    %1630 = vmatpush1.msra.mxu0 %v1504
    %1631 = vmatprep.subr.mxu0 0.0
    %1632 = vmatpush1.msra.mxu0 %v1503
    %1633 = vmatprep.subr.mxu0 0.0
    %1634 = vmatpush1.msra.mxu0 %v1502
    %1635 = vmatprep.subr.mxu0 0.0
    %1636 = vmatpush1.msra.mxu0 %v1501
    %1637 = vmatprep.subr.mxu0 0.0
    %1638 = vmatpush1.msra.mxu0 %v1500
    %1639 = vmatprep.subr.mxu0 0.0
    %1640 = vmatpush1.msra.mxu0 %v1499
    %1641 = vmatprep.subr.mxu0 0.0
    %1642 = vmatpush2.msra.mxu0 %v1530
    %1643 = vmatprep.subr.mxu0 0.0
    %1644 = vmatpush2.msra.mxu0 %v1529
    %1645 = vmatprep.subr.mxu0 0.0
    %1646 = vmatpush2.msra.mxu0 %v1528
    %1647 = vmatprep.subr.mxu0 0.0
    %1648 = vmatpush2.msra.mxu0 %v1527
    %1649 = vmatprep.subr.mxu0 0.0
    %1650 = vmatpush2.msra.mxu0 %v1526
    %1651 = vmatprep.subr.mxu0 0.0
    %1652 = vmatpush2.msra.mxu0 %v1525
    %1653 = vmatprep.subr.mxu0 0.0
    %1654 = vmatpush2.msra.mxu0 %v1524
    %1655 = vmatprep.subr.mxu0 0.0
    %1656 = vmatpush2.msra.mxu0 %v1523
    %1657 = vmatprep.subr.mxu0 0.0
    %1658 = vmatpush2.msra.mxu0 %v1522
    %1659 = vmatprep.subr.mxu0 0.0
    %1660 = vmatpush2.msra.mxu0 %v1521
    %1661 = vmatprep.subr.mxu0 0.0
    %1662 = vmatpush2.msra.mxu0 %v1520
    %1663 = vmatprep.subr.mxu0 0.0
    %1664 = vmatpush2.msra.mxu0 %v1519
    %1665 = vmatprep.subr.mxu0 0.0
    %1666 = vmatpush2.msra.mxu0 %v1518
    %1667 = vmatprep.subr.mxu0 0.0
    %1668 = vmatpush2.msra.mxu0 %v1517
    %1669 = vmatprep.subr.mxu0 0.0
    %1670 = vmatpush2.msra.mxu0 %v1516
    %1671 = vmatprep.subr.mxu0 0.0
    %1672 = vmatpush2.msra.mxu0 %v1515
    %1673 = vmatprep.mubr.f32.mxu0 %v1598
    %1674 = vmatmul.mubr.f32.gmra.mxu0 %v1591
    %v1675 = vpop.f32.mrf.mxu0
    %v1676 = vadd.f32 %v1552, %v1675
    %v1677 = vpop.f32.mrf.mxu0
    %1678 = vdwg.mxu0
    %1679 = vmatprep.subr.mxu0 0.0
    %1680 = vmatpush1.msra.mxu0 %v1546
    %1681 = vmatprep.subr.mxu0 0.0
    %1682 = vmatpush1.msra.mxu0 %v1545
    %1683 = vmatprep.subr.mxu0 0.0
    %1684 = vmatpush1.msra.mxu0 %v1544
    %1685 = vmatprep.subr.mxu0 0.0
    %1686 = vmatpush1.msra.mxu0 %v1543
    %1687 = vmatprep.subr.mxu0 0.0
    %1688 = vmatpush1.msra.mxu0 %v1542
    %1689 = vmatprep.subr.mxu0 0.0
    %1690 = vmatpush1.msra.mxu0 %v1541
    %1691 = vmatprep.subr.mxu0 0.0
    %1692 = vmatpush1.msra.mxu0 %v1540
    %1693 = vmatprep.subr.mxu0 0.0
    %1694 = vmatpush1.msra.mxu0 %v1539
    %1695 = vmatprep.subr.mxu0 0.0
    %1696 = vmatpush1.msra.mxu0 %v1538
    %1697 = vmatprep.subr.mxu0 0.0
    %1698 = vmatpush1.msra.mxu0 %v1537
    %1699 = vmatprep.subr.mxu0 0.0
    %1700 = vmatpush1.msra.mxu0 %v1536
    %1701 = vmatprep.subr.mxu0 0.0
    %1702 = vmatpush1.msra.mxu0 %v1535
    %1703 = vmatprep.subr.mxu0 0.0
    %1704 = vmatpush1.msra.mxu0 %v1534
    %1705 = vmatprep.subr.mxu0 0.0
    %1706 = vmatpush1.msra.mxu0 %v1533
    %1707 = vmatprep.subr.mxu0 0.0
    %1708 = vmatpush1.msra.mxu0 %v1532
    %1709 = vmatprep.subr.mxu0 0.0
    %1710 = vmatpush1.msra.mxu0 %v1531
    %1711 = vmatprep.subr.mxu0 0.0
    %1712 = vmatpush2.msra.mxu0 0.0
    %1713 = vmatprep.subr.mxu0 0.0
    %1714 = vmatpush2.msra.mxu0 0.0
    %1715 = vmatprep.subr.mxu0 0.0
    %1716 = vmatpush2.msra.mxu0 0.0
    %1717 = vmatprep.subr.mxu0 0.0
    %1718 = vmatpush2.msra.mxu0 0.0
    %1719 = vmatprep.subr.mxu0 0.0
    %1720 = vmatpush2.msra.mxu0 0.0
    %1721 = vmatprep.subr.mxu0 0.0
    %1722 = vmatpush2.msra.mxu0 0.0
    %1723 = vmatprep.subr.mxu0 0.0
    %1724 = vmatpush2.msra.mxu0 0.0
    %1725 = vmatprep.subr.mxu0 0.0
    %1726 = vmatpush2.msra.mxu0 0.0
    %1727 = vmatprep.subr.mxu0 0.0
    %1728 = vmatpush2.msra.mxu0 0.0
    %1729 = vmatprep.subr.mxu0 0.0
    %1730 = vmatpush2.msra.mxu0 0.0
    %1731 = vmatprep.subr.mxu0 0.0
    %1732 = vmatpush2.msra.mxu0 0.0
    %1733 = vmatprep.subr.mxu0 0.0
    %1734 = vmatpush2.msra.mxu0 0.0
    %1735 = vmatprep.subr.mxu0 0.0
    %1736 = vmatpush2.msra.mxu0 0.0
    %1737 = vmatprep.subr.mxu0 0.0
    %1738 = vmatpush2.msra.mxu0 0.0
    %1739 = vmatprep.subr.mxu0 0.0
    %1740 = vmatpush2.msra.mxu0 0.0
    %1741 = vmatprep.subr.mxu0 0.0
    %1742 = vmatpush2.msra.mxu0 0.0
    %1743 = vmatprep.mubr.f32.mxu0 0.0
    %1744 = vmatmul.mubr.f32.gmra.mxu0 %v1605
    %v1745 = vpop.f32.mrf.mxu0
    %v1746 = vadd.f32 %v1676, %v1745
    %v1747 = vpop.f32.mrf.mxu0
    %1748 = vdwg.mxu0
    %1749 = vst [vmem:[#allocation8] sm:$0xff] %v1746
    // Predicated region
    $region34: #{tpu_custom_call.1} parent=1 // pred_check
      _
    $region35: #{tpu_custom_call.1} parent=1 // pred_check_branch
      %1751 = sbr.rel (0) target = $region37
    $region36: #{tpu_custom_call.1} parent=1 // pred_region
      %s1753 = ssub.s32 128, 128
      %1754 = vsyncadd [#allocation4], %s1753
      %s1756 = sshll.u32 [#allocation8], 4
      %s1757 = int_to_ptr.vmem [resolvable:$true] %s1756
      %1759 = dma.vmem_to_hbm [thread:$0]  %s1757, 128, %s5, [#allocation4]
    $region37: #{tpu_custom_call.1} parent=1 // pred_fallthru
      _
    // Predicated region
    $region38: #{tpu_custom_call.1} parent=1 // pred_check
      _
    $region39: #{tpu_custom_call.1} parent=1 // pred_check_branch
      %1761 = sbr.rel (0) target = $region41
    $region40: #{tpu_custom_call.1} parent=1 // pred_region
      %1762 = dma.done [#allocation4], 128
    $region41: #{tpu_custom_call.1} parent=1 // pred_fallthru
      _
    %1763 = vsyncpa [#allocation3], 1
    %1764 = vsyncpa [#allocation6], 1
    %1765 = vsyncpa [#allocation4], 1

</llo_original>
